<compile_context>
chip_gen: v7x
topology: tpu7x:2x2x1
jax: 0.10.0
libtpu: 0.0.40
codegen_flags: <defaults>
</compile_context>

<pallas_src>
import jax
import jax.numpy as jnp
from jax.experimental import pallas as pl
from jax.experimental.pallas import tpu as pltpu


def _pick_n_tile(n, cap=128):
    """Largest query tile <= cap that divides N and is a multiple of 8 (else full N)."""
    if n <= cap:
        return n
    for t in range(cap - cap % 8, 7, -8):
        if n % t == 0:
            return t
    return n


def mixed_attention_pallas(params, z_prime, y_prime, x_prime=None, x=None):
    if x_prime is None:
        x_prime = y_prime
    if x is None:
        x = x_prime

    B, N, Qp = y_prime.shape
    _, M, Pp = x_prime.shape
    P = x.shape[-1]
    K, _, Dp = params['Lxp'].shape
    D = params['Thx'].shape[-1]
    Q = params['Thy'].shape[1]
    Rp = params['Lzx'].shape[1]

    inv_temp = 1.0 / float(Dp) ** 0.5          # temperature = sqrt(D')

    # ---------------- wrapper: layout glue + one-off weight folding (tiny) ----------------
    hp = jax.lax.Precision.HIGHEST
    # u[b,k,m,r] = x'[b,m,:] @ Azx[k,r,:] + czx[k,r]     (Lambda^(x) folded into Lambda^(zx))
    Azx = jnp.einsum('krd,kpd->krp', params['Lzx'], params['Lxp'], precision=hp)   # (K,R',P')
    czx = jnp.einsum('krd,kd->kr', params['Lzx'], params['bxp'], precision=hp)     # (K,R')
    # v[b,k,n,r] = y'[b,n,:] @ Bzy[k,:,r] + czy[k,r]     (Lambda^(y) folded into Lambda^(zy))
    Bzy = jnp.einsum('kqd,krd->kqr', params['Lyp'], params['Lzy'], precision=hp)   # (K,Q',R')
    czy = jnp.einsum('krd,kd->kr', params['Lzy'], params['byp'], precision=hp)     # (K,R')

    # Fold the softmax temperature into the score weights once (kernel never rescales scores).
    Azx = Azx * inv_temp
    czx = czx * inv_temp
    Bzy = Bzy * inv_temp
    czy = czy * inv_temp

    azx_cat = Azx.reshape(K * Rp, Pp)                                    # rows: k-major, r-minor
    czx_cat = czx.reshape(K * Rp, 1)
    bzy_cat = jnp.transpose(Bzy, (1, 0, 2)).reshape(Qp, K * Rp)          # cols: k-major, r-minor
    czy_cat = czy.reshape(1, K * Rp)
    thx_cat = jnp.transpose(params['Thx'], (1, 0, 2)).reshape(P, K * D)  # cols: k-major, d-minor
    etax_cat = params['etax'].reshape(1, K * D)
    thyT_cat = jnp.transpose(params['Thy'], (0, 2, 1)).reshape(K * D, Q)  # rows: k-major, d-minor
    etao_row = params['etao'][None, :]                                   # (1, Q)

    # lane-dense activations: M on the lane axis of z'^T and x'^T
    z_t = jnp.transpose(z_prime, (0, 3, 2, 1))       # (B, R', N, M)
    x_kT = jnp.transpose(x_prime, (0, 2, 1))         # (B, P', M)

    tN = _pick_n_tile(N)
    NT = N // tN

    def kernel(yq_ref, xkT_ref, xv_ref, zt_ref,
               azx_ref, czx_ref, bzy_ref, czy_ref,
               thx_ref, etax_ref, thy_ref, etao_ref,
               out_ref):
        yq = yq_ref[0]     # (tN, Q')
        xT = xkT_ref[0]    # (P', M)
        xv = xv_ref[0]     # (M, P)

        # ---- head-batched projections (MXU) ----
        # u_all[k*R'+r, m] = (xbar[b,k,m,:]·Lambda^(zx)_k[r,:]) / sqrt(D')   (lane axis = M)
        u_all = jnp.dot(azx_ref[...], xT, preferred_element_type=jnp.float32) + czx_ref[...]
        # v_all[n, k*R'+r] = (ybar[b,k,n,:]·Lambda^(zy)_k[r,:]) / sqrt(D')
        v_all = jnp.dot(yq, bzy_ref[...], preferred_element_type=jnp.float32) + czy_ref[...]
        # value projection for all heads at once: (M, K*D)
        xproj_all = jnp.dot(xv, thx_ref[...], preferred_element_type=jnp.float32) + etax_ref[...]

        # z'^T per-r lane-dense tiles (tN, M); R' on a cheap leading axis
        z_rs = [zt_ref[0, r] for r in range(Rp)]

        r_heads = []
        for k in range(K):                           # static unroll over heads
            # mixed score (already temperature-scaled), transposed: score_t[n, m] = score[b,k,m,n]
            score_t = None
            for r in range(Rp):                      # static unroll over R' (lane-dense FMAs)
                c = k * Rp + r
                u_row = u_all[c:c + 1, :]            # (1, M)   broadcast over n (sublanes)
                v_col = v_all[:, c:c + 1]            # (tN, 1)  broadcast over m (lanes)
                term = z_rs[r] * (u_row + v_col)
                score_t = term if score_t is None else score_t + term

            # softmax over M (torch dim=-2); M is the minor (lane) axis here
            smax = jnp.max(score_t, axis=-1, keepdims=True)
            p = jnp.exp(score_t - smax)
            attn_t = p * pl.reciprocal(jnp.sum(p, axis=-1, keepdims=True), approx=True)

            # attention-weighted value sum for head k (MXU): (tN, D)
            xproj_k = xproj_all[:, k * D:(k + 1) * D]
            r_heads.append(jnp.dot(attn_t, xproj_k, preferred_element_type=jnp.float32))

        # output projection for all heads in ONE matmul; single lane-dense writeback
        r_all = r_heads[0] if K == 1 else jnp.concatenate(r_heads, axis=-1)   # (tN, K*D)
        out_ref[0] = (jnp.dot(r_all, thy_ref[...], preferred_element_type=jnp.float32)
                      + etao_ref[...])

    const = lambda b, n: (0, 0)

    return pl.pallas_call(
        kernel,
        out_shape=jax.ShapeDtypeStruct((B, N, Q), jnp.float32),
        grid_spec=pltpu.PrefetchScalarGridSpec(
            num_scalar_prefetch=0,
            grid=(B, NT),
            in_specs=[
                pl.BlockSpec((1, tN, Qp), lambda b, n: (b, n, 0)),         # y'
                pl.BlockSpec((1, Pp, M), lambda b, n: (b, 0, 0)),          # x'^T
                pl.BlockSpec((1, M, P), lambda b, n: (b, 0, 0)),           # x
                pl.BlockSpec((1, Rp, tN, M), lambda b, n: (b, 0, n, 0)),   # z'^T  (B, R', N, M)
                pl.BlockSpec((K * Rp, Pp), const),                         # folded Lzx·Lx^T
                pl.BlockSpec((K * Rp, 1), const),                          # folded Lzx·beta^(x)
                pl.BlockSpec((Qp, K * Rp), const),                         # folded Ly·Lzy^T
                pl.BlockSpec((1, K * Rp), const),                          # folded Lzy·beta^(y)
                pl.BlockSpec((P, K * D), const),                           # Theta^(x) (all heads)
                pl.BlockSpec((1, K * D), const),                           # eta (all heads)
                pl.BlockSpec((K * D, Q), const),                           # Theta^(y)^T (all heads)
                pl.BlockSpec((1, Q), const),                               # eta^(o)
            ],
            out_specs=pl.BlockSpec((1, tN, Q), lambda b, n: (b, n, 0)),
        ),
        compiler_params=pltpu.CompilerParams(
            dimension_semantics=("parallel", "parallel")),
    )(y_prime, x_kT, x, z_t,
      azx_cat, czx_cat, bzy_cat, czy_cat,
      thx_cat, etax_cat, thyT_cat, etao_row)


def mixed_attention_reference(params, z_prime, y_prime, x_prime=None, x=None):
    """Pure-JAX reference mirroring MultiHeadMixedAttention.forward exactly."""
    if x_prime is None:
        x_prime = y_prime
    if x is None:
        x = x_prime
    hp = jax.lax.Precision.HIGHEST
    Dp = params['Lxp'].shape[-1]
    xbar = jnp.einsum('kpd,bmp->bkmd', params['Lxp'], x_prime, precision=hp) \
        + params['bxp'][None, :, None, :]
    ybar = jnp.einsum('kqd,bnq->bknd', params['Lyp'], y_prime, precision=hp) \
        + params['byp'][None, :, None, :]
    zbx = jnp.einsum('krd,bmnr->bkmnd', params['Lzx'], z_prime, precision=hp)
    score = jnp.einsum('bkmd,bkmnd->bkmn', xbar, zbx, precision=hp)
    zby = jnp.einsum('krd,bmnr->bkmnd', params['Lzy'], z_prime, precision=hp)
    score = score + jnp.einsum('bknd,bkmnd->bkmn', ybar, zby, precision=hp)
    attn = jax.nn.softmax(score / jnp.sqrt(jnp.float32(Dp)), axis=-2)    # softmax over M
    xproj = jnp.einsum('kpd,bmp->bkmd', params['Thx'], x, precision=hp) \
        + params['etax'][None, :, None, :]
    r = jnp.einsum('bkmn,bkmd->bknd', attn, xproj, precision=hp)
    y = jnp.einsum('kqd,bknd->bnq', params['Thy'], r, precision=hp) + params['etao'][None, None, :]
    return y


def init_params(key, K, P, Q, D, Pp, Qp, Dp, Rp):
    """Deterministic synthetic parameters (shapes match the module's __init__)."""
    ks = jax.random.split(key, 10)
    s = 0.1
    return {
        'Lxp':  jax.random.normal(ks[0], (K, Pp, Dp), jnp.float32) * s,   # projx' weight
        'bxp':  jax.random.normal(ks[1], (K, Dp), jnp.float32) * s,       # projx' bias
        'Lyp':  jax.random.normal(ks[2], (K, Qp, Dp), jnp.float32) * s,   # projy' weight
        'byp':  jax.random.normal(ks[3], (K, Dp), jnp.float32) * s,       # projy' bias
        'Lzx':  jax.random.normal(ks[4], (K, Rp, Dp), jnp.float32) * s,   # projzx weight (no bias)
        'Lzy':  jax.random.normal(ks[5], (K, Rp, Dp), jnp.float32) * s,   # projzy weight (no bias)
        'Thx':  jax.random.normal(ks[6], (K, P, D), jnp.float32) * s,     # projx weight
        'etax': jax.random.normal(ks[7], (K, D), jnp.float32) * s,        # projx bias
        'Thy':  jax.random.normal(ks[8], (K, Q, D), jnp.float32) * s,     # projy weight
        'etao': jax.random.normal(ks[9], (Q,), jnp.float32) * s,          # projy bias
    }


if __name__ == "__main__":
    # small shapes consistent with the module: K heads, P=Q=P'=Q', D=D'=Q//K
    B, M, N = 2, 8, 8
    K = 2
    P = Q = Pp = Qp = 32
    D = Dp = Q // K          # 16
    Rp = 4

    key = jax.random.PRNGKey(0)
    kp, ky, kz = jax.random.split(key, 3)
    params = init_params(kp, K, P, Q, D, Pp, Qp, Dp, Rp)
    y_prime = jax.random.normal(ky, (B, N, Qp), jnp.float32)    # x' = x = y' (M == N)
    z_prime = jax.random.normal(kz, (B, M, N, Rp), jnp.float32)

    out = mixed_attention_pallas(params, z_prime, y_prime)
    out = jax.block_until_ready(out)

    ref = mixed_attention_reference(params, z_prime, y_prime)
    err = float(jnp.max(jnp.abs(out - ref)))
    assert out.shape == (B, N, Q), out.shape
    assert err < 1e-3, f"max abs err {err}"
    print("KERNEL_OK")
</pallas_src>

<mosaic_0001>
module attributes {stable_mosaic.version = 11 : i64} {
  func.func @kernel(%arg0: i32, %arg1: i32, %arg2: memref<1x8x32xf32, #tpu.memory_space<vmem>>, %arg3: memref<1x32x8xf32, #tpu.memory_space<vmem>>, %arg4: memref<1x8x32xf32, #tpu.memory_space<vmem>>, %arg5: memref<1x4x8x8xf32, #tpu.memory_space<vmem>>, %arg6: memref<8x32xf32, #tpu.memory_space<vmem>>, %arg7: memref<8x1xf32, #tpu.memory_space<vmem>>, %arg8: memref<32x8xf32, #tpu.memory_space<vmem>>, %arg9: memref<1x8xf32, #tpu.memory_space<vmem>>, %arg10: memref<32x32xf32, #tpu.memory_space<vmem>>, %arg11: memref<1x32xf32, #tpu.memory_space<vmem>>, %arg12: memref<32x32xf32, #tpu.memory_space<vmem>>, %arg13: memref<1x32xf32, #tpu.memory_space<vmem>>, %arg14: memref<1x8x32xf32, #tpu.memory_space<vmem>>) attributes {dimension_semantics = [#tpu.dimension_semantics<parallel>, #tpu.dimension_semantics<parallel>], iteration_bounds = array<i64: 2, 1>, scalar_prefetch = 0 : i64, scratch_operands = 0 : i64, tpu.core_type = #tpu.core_type<tc>, window_params = [{transform_indices = @transform_0, window_bounds = array<i64: 1, 8, 32>}, {transform_indices = @transform_1, window_bounds = array<i64: 1, 32, 8>}, {transform_indices = @transform_2, window_bounds = array<i64: 1, 8, 32>}, {transform_indices = @transform_3, window_bounds = array<i64: 1, 4, 8, 8>}, {pipeline_mode = #tpu.pipeline_mode<synchronous>, transform_indices = @transform_4, window_bounds = array<i64: 8, 32>}, {pipeline_mode = #tpu.pipeline_mode<synchronous>, transform_indices = @transform_5, window_bounds = array<i64: 8, 1>}, {pipeline_mode = #tpu.pipeline_mode<synchronous>, transform_indices = @transform_6, window_bounds = array<i64: 32, 8>}, {pipeline_mode = #tpu.pipeline_mode<synchronous>, transform_indices = @transform_7, window_bounds = array<i64: 1, 8>}, {pipeline_mode = #tpu.pipeline_mode<synchronous>, transform_indices = @transform_8, window_bounds = array<i64: 32, 32>}, {pipeline_mode = #tpu.pipeline_mode<synchronous>, transform_indices = @transform_9, window_bounds = array<i64: 1, 32>}, {pipeline_mode = #tpu.pipeline_mode<synchronous>, transform_indices = @transform_10, window_bounds = array<i64: 32, 32>}, {pipeline_mode = #tpu.pipeline_mode<synchronous>, transform_indices = @transform_11, window_bounds = array<i64: 1, 32>}, {transform_indices = @transform_12, window_bounds = array<i64: 1, 8, 32>}]} {
    %c0 = arith.constant 0 : index
    %c0_0 = arith.constant 0 : index
    %c0_1 = arith.constant 0 : index
    %0 = vector.load %arg2[%c0, %c0_0, %c0_1] : memref<1x8x32xf32, #tpu.memory_space<vmem>>, vector<1x8x32xf32>
    %1 = vector.shape_cast %0 : vector<1x8x32xf32> to vector<8x32xf32>
    %c0_2 = arith.constant 0 : index
    %c0_3 = arith.constant 0 : index
    %c0_4 = arith.constant 0 : index
    %2 = vector.load %arg3[%c0_2, %c0_3, %c0_4] : memref<1x32x8xf32, #tpu.memory_space<vmem>>, vector<1x32x8xf32>
    %3 = vector.shape_cast %2 : vector<1x32x8xf32> to vector<32x8xf32>
    %c0_5 = arith.constant 0 : index
    %c0_6 = arith.constant 0 : index
    %c0_7 = arith.constant 0 : index
    %4 = vector.load %arg4[%c0_5, %c0_6, %c0_7] : memref<1x8x32xf32, #tpu.memory_space<vmem>>, vector<1x8x32xf32>
    %5 = vector.shape_cast %4 : vector<1x8x32xf32> to vector<8x32xf32>
    %c0_8 = arith.constant 0 : index
    %c0_9 = arith.constant 0 : index
    %6 = vector.load %arg6[%c0_8, %c0_9] : memref<8x32xf32, #tpu.memory_space<vmem>>, vector<8x32xf32>
    %cst = arith.constant dense<0.000000e+00> : vector<8x8xf32>
    %7 = tpu.matmul %6, %3, %cst {dimension_numbers = #tpu.dot_dimension_numbers<[1], [0], [0], [1], [0, 0, 1, 1], [], []>} : vector<8x32xf32>, vector<32x8xf32>, vector<8x8xf32> -> vector<8x8xf32>
    %c0_10 = arith.constant 0 : index
    %c0_11 = arith.constant 0 : index
    %8 = vector.load %arg7[%c0_10, %c0_11] : memref<8x1xf32, #tpu.memory_space<vmem>>, vector<8x1xf32>
    %9 = vector.broadcast %8 : vector<8x1xf32> to vector<8x8xf32>
    %10 = arith.addf %7, %9 : vector<8x8xf32>
    %c0_12 = arith.constant 0 : index
    %c0_13 = arith.constant 0 : index
    %11 = vector.load %arg8[%c0_12, %c0_13] : memref<32x8xf32, #tpu.memory_space<vmem>>, vector<32x8xf32>
    %cst_14 = arith.constant dense<0.000000e+00> : vector<8x8xf32>
    %12 = tpu.matmul %1, %11, %cst_14 {dimension_numbers = #tpu.dot_dimension_numbers<[1], [0], [0], [1], [0, 0, 1, 1], [], []>} : vector<8x32xf32>, vector<32x8xf32>, vector<8x8xf32> -> vector<8x8xf32>
    %c0_15 = arith.constant 0 : index
    %c0_16 = arith.constant 0 : index
    %13 = vector.load %arg9[%c0_15, %c0_16] : memref<1x8xf32, #tpu.memory_space<vmem>>, vector<1x8xf32>
    %14 = vector.broadcast %13 : vector<1x8xf32> to vector<8x8xf32>
    %15 = arith.addf %12, %14 : vector<8x8xf32>
    %c0_17 = arith.constant 0 : index
    %c0_18 = arith.constant 0 : index
    %16 = vector.load %arg10[%c0_17, %c0_18] : memref<32x32xf32, #tpu.memory_space<vmem>>, vector<32x32xf32>
    %cst_19 = arith.constant dense<0.000000e+00> : vector<8x32xf32>
    %17 = tpu.matmul %5, %16, %cst_19 {dimension_numbers = #tpu.dot_dimension_numbers<[1], [0], [0], [1], [0, 0, 1, 1], [], []>} : vector<8x32xf32>, vector<32x32xf32>, vector<8x32xf32> -> vector<8x32xf32>
    %c0_20 = arith.constant 0 : index
    %c0_21 = arith.constant 0 : index
    %18 = vector.load %arg11[%c0_20, %c0_21] : memref<1x32xf32, #tpu.memory_space<vmem>>, vector<1x32xf32>
    %19 = vector.broadcast %18 : vector<1x32xf32> to vector<8x32xf32>
    %20 = arith.addf %17, %19 : vector<8x32xf32>
    %c0_22 = arith.constant 0 : index
    %c0_23 = arith.constant 0 : index
    %c0_24 = arith.constant 0 : index
    %c0_25 = arith.constant 0 : index
    %21 = vector.load %arg5[%c0_22, %c0_23, %c0_24, %c0_25] : memref<1x4x8x8xf32, #tpu.memory_space<vmem>>, vector<1x1x8x8xf32>
    %22 = vector.shape_cast %21 : vector<1x1x8x8xf32> to vector<8x8xf32>
    %c0_26 = arith.constant 0 : index
    %c1 = arith.constant 1 : index
    %c0_27 = arith.constant 0 : index
    %c0_28 = arith.constant 0 : index
    %23 = vector.load %arg5[%c0_26, %c1, %c0_27, %c0_28] : memref<1x4x8x8xf32, #tpu.memory_space<vmem>>, vector<1x1x8x8xf32>
    %24 = vector.shape_cast %23 : vector<1x1x8x8xf32> to vector<8x8xf32>
    %c0_29 = arith.constant 0 : index
    %c2 = arith.constant 2 : index
    %c0_30 = arith.constant 0 : index
    %c0_31 = arith.constant 0 : index
    %25 = vector.load %arg5[%c0_29, %c2, %c0_30, %c0_31] : memref<1x4x8x8xf32, #tpu.memory_space<vmem>>, vector<1x1x8x8xf32>
    %26 = vector.shape_cast %25 : vector<1x1x8x8xf32> to vector<8x8xf32>
    %c0_32 = arith.constant 0 : index
    %c3 = arith.constant 3 : index
    %c0_33 = arith.constant 0 : index
    %c0_34 = arith.constant 0 : index
    %27 = vector.load %arg5[%c0_32, %c3, %c0_33, %c0_34] : memref<1x4x8x8xf32, #tpu.memory_space<vmem>>, vector<1x1x8x8xf32>
    %28 = vector.shape_cast %27 : vector<1x1x8x8xf32> to vector<8x8xf32>
    %29 = vector.extract_strided_slice %10 {offsets = [0, 0], sizes = [1, 8], strides = [1, 1]} : vector<8x8xf32> to vector<1x8xf32>
    %30 = vector.extract_strided_slice %15 {offsets = [0, 0], sizes = [8, 1], strides = [1, 1]} : vector<8x8xf32> to vector<8x1xf32>
    %31 = vector.broadcast %29 : vector<1x8xf32> to vector<8x8xf32>
    %32 = vector.broadcast %30 : vector<8x1xf32> to vector<8x8xf32>
    %33 = arith.addf %31, %32 : vector<8x8xf32>
    %34 = arith.mulf %22, %33 : vector<8x8xf32>
    %35 = vector.extract_strided_slice %10 {offsets = [1, 0], sizes = [1, 8], strides = [1, 1]} : vector<8x8xf32> to vector<1x8xf32>
    %36 = vector.extract_strided_slice %15 {offsets = [0, 1], sizes = [8, 1], strides = [1, 1]} : vector<8x8xf32> to vector<8x1xf32>
    %37 = vector.broadcast %35 : vector<1x8xf32> to vector<8x8xf32>
    %38 = vector.broadcast %36 : vector<8x1xf32> to vector<8x8xf32>
    %39 = arith.addf %37, %38 : vector<8x8xf32>
    %40 = arith.mulf %24, %39 : vector<8x8xf32>
    %41 = arith.addf %34, %40 : vector<8x8xf32>
    %42 = vector.extract_strided_slice %10 {offsets = [2, 0], sizes = [1, 8], strides = [1, 1]} : vector<8x8xf32> to vector<1x8xf32>
    %43 = vector.extract_strided_slice %15 {offsets = [0, 2], sizes = [8, 1], strides = [1, 1]} : vector<8x8xf32> to vector<8x1xf32>
    %44 = vector.broadcast %42 : vector<1x8xf32> to vector<8x8xf32>
    %45 = vector.broadcast %43 : vector<8x1xf32> to vector<8x8xf32>
    %46 = arith.addf %44, %45 : vector<8x8xf32>
    %47 = arith.mulf %26, %46 : vector<8x8xf32>
    %48 = arith.addf %41, %47 : vector<8x8xf32>
    %49 = vector.extract_strided_slice %10 {offsets = [3, 0], sizes = [1, 8], strides = [1, 1]} : vector<8x8xf32> to vector<1x8xf32>
    %50 = vector.extract_strided_slice %15 {offsets = [0, 3], sizes = [8, 1], strides = [1, 1]} : vector<8x8xf32> to vector<8x1xf32>
    %51 = vector.broadcast %49 : vector<1x8xf32> to vector<8x8xf32>
    %52 = vector.broadcast %50 : vector<8x1xf32> to vector<8x8xf32>
    %53 = arith.addf %51, %52 : vector<8x8xf32>
    %54 = arith.mulf %28, %53 : vector<8x8xf32>
    %55 = arith.addf %48, %54 : vector<8x8xf32>
    %cst_35 = arith.constant dense<0xFF800000> : vector<8xf32>
    %56 = vector.multi_reduction <maximumf>, %55, %cst_35 [1] : vector<8x8xf32> to vector<8xf32>
    %57 = vector.shape_cast %56 : vector<8xf32> to vector<8x1xf32>
    %58 = vector.broadcast %57 : vector<8x1xf32> to vector<8x8xf32>
    %59 = arith.subf %55, %58 : vector<8x8xf32>
    %60 = math.exp %59 : vector<8x8xf32>
    %cst_36 = arith.constant dense<0.000000e+00> : vector<8xf32>
    %61 = vector.multi_reduction <add>, %60, %cst_36 [1] : vector<8x8xf32> to vector<8xf32>
    %62 = vector.shape_cast %61 : vector<8xf32> to vector<8x1xf32>
    %63 = tpu.reciprocal %62 {approx = true} : vector<8x1xf32> -> vector<8x1xf32>
    %64 = vector.broadcast %63 : vector<8x1xf32> to vector<8x8xf32>
    %65 = arith.mulf %60, %64 : vector<8x8xf32>
    %66 = vector.extract_strided_slice %20 {offsets = [0, 0], sizes = [8, 16], strides = [1, 1]} : vector<8x32xf32> to vector<8x16xf32>
    %cst_37 = arith.constant dense<0.000000e+00> : vector<8x16xf32>
    %67 = tpu.matmul %65, %66, %cst_37 {dimension_numbers = #tpu.dot_dimension_numbers<[1], [0], [0], [1], [0, 0, 1, 1], [], []>} : vector<8x8xf32>, vector<8x16xf32>, vector<8x16xf32> -> vector<8x16xf32>
    %68 = vector.extract_strided_slice %10 {offsets = [4, 0], sizes = [1, 8], strides = [1, 1]} : vector<8x8xf32> to vector<1x8xf32>
    %69 = vector.extract_strided_slice %15 {offsets = [0, 4], sizes = [8, 1], strides = [1, 1]} : vector<8x8xf32> to vector<8x1xf32>
    %70 = vector.broadcast %68 : vector<1x8xf32> to vector<8x8xf32>
    %71 = vector.broadcast %69 : vector<8x1xf32> to vector<8x8xf32>
    %72 = arith.addf %70, %71 : vector<8x8xf32>
    %73 = arith.mulf %22, %72 : vector<8x8xf32>
    %74 = vector.extract_strided_slice %10 {offsets = [5, 0], sizes = [1, 8], strides = [1, 1]} : vector<8x8xf32> to vector<1x8xf32>
    %75 = vector.extract_strided_slice %15 {offsets = [0, 5], sizes = [8, 1], strides = [1, 1]} : vector<8x8xf32> to vector<8x1xf32>
    %76 = vector.broadcast %74 : vector<1x8xf32> to vector<8x8xf32>
    %77 = vector.broadcast %75 : vector<8x1xf32> to vector<8x8xf32>
    %78 = arith.addf %76, %77 : vector<8x8xf32>
    %79 = arith.mulf %24, %78 : vector<8x8xf32>
    %80 = arith.addf %73, %79 : vector<8x8xf32>
    %81 = vector.extract_strided_slice %10 {offsets = [6, 0], sizes = [1, 8], strides = [1, 1]} : vector<8x8xf32> to vector<1x8xf32>
    %82 = vector.extract_strided_slice %15 {offsets = [0, 6], sizes = [8, 1], strides = [1, 1]} : vector<8x8xf32> to vector<8x1xf32>
    %83 = vector.broadcast %81 : vector<1x8xf32> to vector<8x8xf32>
    %84 = vector.broadcast %82 : vector<8x1xf32> to vector<8x8xf32>
    %85 = arith.addf %83, %84 : vector<8x8xf32>
    %86 = arith.mulf %26, %85 : vector<8x8xf32>
    %87 = arith.addf %80, %86 : vector<8x8xf32>
    %88 = vector.extract_strided_slice %10 {offsets = [7, 0], sizes = [1, 8], strides = [1, 1]} : vector<8x8xf32> to vector<1x8xf32>
    %89 = vector.extract_strided_slice %15 {offsets = [0, 7], sizes = [8, 1], strides = [1, 1]} : vector<8x8xf32> to vector<8x1xf32>
    %90 = vector.broadcast %88 : vector<1x8xf32> to vector<8x8xf32>
    %91 = vector.broadcast %89 : vector<8x1xf32> to vector<8x8xf32>
    %92 = arith.addf %90, %91 : vector<8x8xf32>
    %93 = arith.mulf %28, %92 : vector<8x8xf32>
    %94 = arith.addf %87, %93 : vector<8x8xf32>
    %cst_38 = arith.constant dense<0xFF800000> : vector<8xf32>
    %95 = vector.multi_reduction <maximumf>, %94, %cst_38 [1] : vector<8x8xf32> to vector<8xf32>
    %96 = vector.shape_cast %95 : vector<8xf32> to vector<8x1xf32>
    %97 = vector.broadcast %96 : vector<8x1xf32> to vector<8x8xf32>
    %98 = arith.subf %94, %97 : vector<8x8xf32>
    %99 = math.exp %98 : vector<8x8xf32>
    %cst_39 = arith.constant dense<0.000000e+00> : vector<8xf32>
    %100 = vector.multi_reduction <add>, %99, %cst_39 [1] : vector<8x8xf32> to vector<8xf32>
    %101 = vector.shape_cast %100 : vector<8xf32> to vector<8x1xf32>
    %102 = tpu.reciprocal %101 {approx = true} : vector<8x1xf32> -> vector<8x1xf32>
    %103 = vector.broadcast %102 : vector<8x1xf32> to vector<8x8xf32>
    %104 = arith.mulf %99, %103 : vector<8x8xf32>
    %105 = vector.extract_strided_slice %20 {offsets = [0, 16], sizes = [8, 16], strides = [1, 1]} : vector<8x32xf32> to vector<8x16xf32>
    %cst_40 = arith.constant dense<0.000000e+00> : vector<8x16xf32>
    %106 = tpu.matmul %104, %105, %cst_40 {dimension_numbers = #tpu.dot_dimension_numbers<[1], [0], [0], [1], [0, 0, 1, 1], [], []>} : vector<8x8xf32>, vector<8x16xf32>, vector<8x16xf32> -> vector<8x16xf32>
    %107 = tpu.concatenate %67, %106 in 1 : vector<8x16xf32>, vector<8x16xf32> -> vector<8x32xf32>
    %c0_41 = arith.constant 0 : index
    %c0_42 = arith.constant 0 : index
    %108 = vector.load %arg12[%c0_41, %c0_42] : memref<32x32xf32, #tpu.memory_space<vmem>>, vector<32x32xf32>
    %cst_43 = arith.constant dense<0.000000e+00> : vector<8x32xf32>
    %109 = tpu.matmul %107, %108, %cst_43 {dimension_numbers = #tpu.dot_dimension_numbers<[1], [0], [0], [1], [0, 0, 1, 1], [], []>} : vector<8x32xf32>, vector<32x32xf32>, vector<8x32xf32> -> vector<8x32xf32>
    %c0_44 = arith.constant 0 : index
    %c0_45 = arith.constant 0 : index
    %110 = vector.load %arg13[%c0_44, %c0_45] : memref<1x32xf32, #tpu.memory_space<vmem>>, vector<1x32xf32>
    %111 = vector.broadcast %110 : vector<1x32xf32> to vector<8x32xf32>
    %112 = arith.addf %109, %111 : vector<8x32xf32>
    %c0_46 = arith.constant 0 : index
    %c0_47 = arith.constant 0 : index
    %c0_48 = arith.constant 0 : index
    %113 = vector.load %arg14[%c0_46, %c0_47, %c0_48] : memref<1x8x32xf32, #tpu.memory_space<vmem>>, vector<1x8x32xf32>
    %114 = vector.shape_cast %113 : vector<1x8x32xf32> to vector<8x32xf32>
    %115 = vector.shape_cast %112 : vector<8x32xf32> to vector<1x8x32xf32>
    tpu.vector_store %arg14[%c0_46, %c0_47, %c0_48], %115 {strides = array<i32>} : memref<1x8x32xf32, #tpu.memory_space<vmem>>, vector<1x8x32xf32>,
    return
  }
  func.func @transform_0(%arg0: i32, %arg1: i32) -> (i32, i32, i32) {
    %c0_i32 = arith.constant 0 : i32
    %c0_i32_0 = arith.constant 0 : i32
    return %arg0, %arg1, %c0_i32 : i32, i32, i32
  }
  func.func @transform_1(%arg0: i32, %arg1: i32) -> (i32, i32, i32) {
    %c0_i32 = arith.constant 0 : i32
    %c0_i32_0 = arith.constant 0 : i32
    %c0_i32_1 = arith.constant 0 : i32
    return %arg0, %c0_i32, %c0_i32_0 : i32, i32, i32
  }
  func.func @transform_2(%arg0: i32, %arg1: i32) -> (i32, i32, i32) {
    %c0_i32 = arith.constant 0 : i32
    %c0_i32_0 = arith.constant 0 : i32
    %c0_i32_1 = arith.constant 0 : i32
    return %arg0, %c0_i32, %c0_i32_0 : i32, i32, i32
  }
  func.func @transform_3(%arg0: i32, %arg1: i32) -> (i32, i32, i32, i32) {
    %c0_i32 = arith.constant 0 : i32
    %c0_i32_0 = arith.constant 0 : i32
    %c0_i32_1 = arith.constant 0 : i32
    return %arg0, %c0_i32, %arg1, %c0_i32_0 : i32, i32, i32, i32
  }
  func.func @transform_4(%arg0: i32, %arg1: i32) -> (i32, i32) {
    %c0_i32 = arith.constant 0 : i32
    %c0_i32_0 = arith.constant 0 : i32
    %c0_i32_1 = arith.constant 0 : i32
    return %c0_i32, %c0_i32_0 : i32, i32
  }
  func.func @transform_5(%arg0: i32, %arg1: i32) -> (i32, i32) {
    %c0_i32 = arith.constant 0 : i32
    %c0_i32_0 = arith.constant 0 : i32
    %c0_i32_1 = arith.constant 0 : i32
    return %c0_i32, %c0_i32_0 : i32, i32
  }
  func.func @transform_6(%arg0: i32, %arg1: i32) -> (i32, i32) {
    %c0_i32 = arith.constant 0 : i32
    %c0_i32_0 = arith.constant 0 : i32
    %c0_i32_1 = arith.constant 0 : i32
    return %c0_i32, %c0_i32_0 : i32, i32
  }
  func.func @transform_7(%arg0: i32, %arg1: i32) -> (i32, i32) {
    %c0_i32 = arith.constant 0 : i32
    %c0_i32_0 = arith.constant 0 : i32
    %c0_i32_1 = arith.constant 0 : i32
    return %c0_i32, %c0_i32_0 : i32, i32
  }
  func.func @transform_8(%arg0: i32, %arg1: i32) -> (i32, i32) {
    %c0_i32 = arith.constant 0 : i32
    %c0_i32_0 = arith.constant 0 : i32
    %c0_i32_1 = arith.constant 0 : i32
    return %c0_i32, %c0_i32_0 : i32, i32
  }
  func.func @transform_9(%arg0: i32, %arg1: i32) -> (i32, i32) {
    %c0_i32 = arith.constant 0 : i32
    %c0_i32_0 = arith.constant 0 : i32
    %c0_i32_1 = arith.constant 0 : i32
    return %c0_i32, %c0_i32_0 : i32, i32
  }
  func.func @transform_10(%arg0: i32, %arg1: i32) -> (i32, i32) {
    %c0_i32 = arith.constant 0 : i32
    %c0_i32_0 = arith.constant 0 : i32
    %c0_i32_1 = arith.constant 0 : i32
    return %c0_i32, %c0_i32_0 : i32, i32
  }
  func.func @transform_11(%arg0: i32, %arg1: i32) -> (i32, i32) {
    %c0_i32 = arith.constant 0 : i32
    %c0_i32_0 = arith.constant 0 : i32
    %c0_i32_1 = arith.constant 0 : i32
    return %c0_i32, %c0_i32_0 : i32, i32
  }
  func.func @transform_12(%arg0: i32, %arg1: i32) -> (i32, i32, i32) {
    %c0_i32 = arith.constant 0 : i32
    %c0_i32_0 = arith.constant 0 : i32
    return %arg0, %arg1, %c0_i32 : i32, i32, i32
  }
}

</mosaic_0001>

<llo_original>
// kernel: tpu_custom_call.1
$region0: #{tpu_custom_call.1}
  #allocation0 [shape = 'u32[]', space=smem, size = 0x4, offset = 0x4, fixed_abs, tag = 'smem constant byte address 0x4 - core index']
  #allocation1 [shape = 'u32[144,128]{1,0:T(1,128)}', space=vmem, size = 0x12000, scoped, tag = 'internal scratch']
  %s0 = inlined_call_operand.hbm [shape: f32[2,8,32], index: 0, kind: input, shape index: {}]
  %s1 = inlined_call_operand.vmem [shape: f32[2,32,8], index: 1, kind: input, shape index: {}]
  %s2 = inlined_call_operand.hbm [shape: f32[2,8,32], index: 2, kind: input, shape index: {}]
  %s3 = inlined_call_operand.vmem [shape: f32[2,4,8,8], index: 3, kind: input, shape index: {}]
  %s4 = inlined_call_operand.vmem [shape: f32[8,32], index: 4, kind: input, shape index: {}]
  %s5 = inlined_call_operand.vmem [shape: f32[8,1], index: 5, kind: input, shape index: {}]
  %s6 = inlined_call_operand.vmem [shape: f32[32,8], index: 6, kind: input, shape index: {}]
  %s7 = inlined_call_operand.vmem [shape: f32[1,8], index: 7, kind: input, shape index: {}]
  %s8 = inlined_call_operand.vmem [shape: f32[32,32], index: 8, kind: input, shape index: {}]
  %s9 = inlined_call_operand.vmem [shape: f32[1,32], index: 9, kind: input, shape index: {}]
  %s10 = inlined_call_operand.vmem [shape: f32[32,32], index: 10, kind: input, shape index: {}]
  %s11 = inlined_call_operand.vmem [shape: f32[1,32], index: 11, kind: input, shape index: {}]
  %s12 = inlined_call_operand.hbm [shape: f32[2,8,32], index: 12, kind: output, shape index: {}]
  %s13 = sld [smem:[#allocation0]]
  $region89: #{tpu_custom_call.1} parent=0
    _
  %s15 = ssub.s32 1, %s13
  %s16 = scalar_select 0, %s15, %s13
  $region1: #{tpu_custom_call.1} parent=0
    #allocation2 [shape = 'u8[8192]{0}', space=vmem, size = 0x2000, scoped, tag = 'input window, operand 0']
    #allocation3 [shape = 's32[2]{0}', space=sflag, size = 0x8, scoped, tag = 'scoped memory for tpu_custom_call.1']
    #allocation4 [shape = 's32[2]{0}', space=sflag, size = 0x8, scoped, tag = 'scoped memory for tpu_custom_call.1']
    #allocation5 [shape = 'u8[8192]{0}', space=vmem, size = 0x2000, scoped, tag = 'input window, operand 2']
    #allocation6 [shape = 's32[2]{0}', space=sflag, size = 0x8, scoped, tag = 'scoped memory for tpu_custom_call.1']
    #allocation7 [shape = 'u8[8192]{0}', space=vmem, size = 0x2000, scoped, tag = 'output window, operand 0']
    %17 = vsyncpa [#allocation3], 0
    %s18 = scalar_lea.sflag [#allocation3], 1
    %19 = vsyncpa %s18, 0
    %20 = vsyncpa [#allocation6], 0
    %s21 = scalar_lea.sflag [#allocation6], 1
    %22 = vsyncpa %s21, 0
    %23 = vsyncpa [#allocation4], 0
    %s24 = scalar_lea.sflag [#allocation4], 1
    %25 = vsyncpa %s24, 0
    loop: start=0, step=1, limit=4
    $region2: #{tpu_custom_call.1} parent=1 // loop_pre_header
      _
    $region3: #{tpu_custom_call.1} parent=1 // loop_header
      %s27 = sphi 0, %s31
      %p28 = scmp.ge.s32.totalorder %s27, 4
      %s34 = sphi 0, %s46
      %s35 = sphi 0, %s42
      %s36 = sphi 0, %s34
      %s37 = sphi 0, %s35
      %s38 = sphi 0, %s36
      %s39 = sphi 0, %s37
      %s51 = sphi 0, %s53
      %s54 = sphi 0, %s51
      %s55 = sphi 0, %s54
      %s71 = sphi 0, %s55
      %s77 = sphi 0, %s79
      %s80 = sphi 0, %s77
      %s81 = sphi 0, %s80
      %s97 = sphi 0, %s81
      %s103 = sphi 0, %s105
      %s106 = sphi 0, %s103
      %s107 = sphi 0, %s106
      %s123 = sphi 0, %s107
      %s131 = sphi 0, %s133
      %s134 = sphi 0, %s131
      %s135 = sphi 0, %s134
      %s151 = sphi 0, %s135
      %s155 = sphi 0, %s155
      %s157 = sphi 0, %s155
      %s158 = sphi 0, %s157
      %s172 = sphi 0, %s158
      %s176 = sphi 0, %s176
      %s178 = sphi 0, %s176
      %s179 = sphi 0, %s178
      %s193 = sphi 0, %s179
      %s197 = sphi 0, %s197
      %s199 = sphi 0, %s197
      %s200 = sphi 0, %s199
      %s214 = sphi 0, %s200
      %s218 = sphi 0, %s218
      %s220 = sphi 0, %s218
      %s221 = sphi 0, %s220
      %s235 = sphi 0, %s221
      %s239 = sphi 0, %s239
      %s241 = sphi 0, %s239
      %s242 = sphi 0, %s241
      %s256 = sphi 0, %s242
      %s260 = sphi 0, %s260
      %s262 = sphi 0, %s260
      %s263 = sphi 0, %s262
      %s277 = sphi 0, %s263
      %s281 = sphi 0, %s281
      %s283 = sphi 0, %s281
      %s284 = sphi 0, %s283
      %s298 = sphi 0, %s284
      %s302 = sphi 0, %s302
      %s304 = sphi 0, %s302
      %s305 = sphi 0, %s304
      %s319 = sphi 0, %s305
      %s327 = sphi 0, %s329
      %s330 = sphi 0, %s327
      %s331 = sphi 0, %s330
      %s347 = sphi 0, %s331
    $region4: #{tpu_custom_call.1} parent=1 // loop_header_branch
      %30 = sbr.rel (%p28) target = $region8
    $region5: #{tpu_custom_call.1} parent=1 // loop_body
      %s32 = ssub.s32 %s27, 1
      %s33 = ssub.s32 %s27, 2
      %s40 = sadd.s32 1, %s35
      %p41 = scmp.ge.s32.totalorder %s40, 1
      %s42 = scalar_select %p41, 0, %s40
      %s43 = sadd.s32 1, %s34
      %s44 = scalar_select %p41, %s43, %s34
      %p45 = scmp.ge.s32.totalorder %s44, 2
      %s46 = scalar_select %p45, 0, %s44
      %s47 = ssub.s32 %s34, %s46
      %s48 = ssub.s32 %s35, %s42
      %s49 = sor.u32 %s47, %s48
      %p50 = scmp.eq.s32.totalorder %s49, 0
      %s52 = sadd.s32 %s51, 1
      %s53 = scalar_select %p50, %s51, %s52
      %p56 = pneg %p50
      %p57 = scmp.eq.s32.totalorder %s27, 1
      %p58 = por %p56, %p57
      %p59 = scmp.ne.s32.totalorder %s51, %s54
      %p60 = scmp.eq.s32.totalorder %s27, 0
      %p61 = por %p59, %p60
      %p62 = scmp.ne.s32.totalorder %s51, %s54
      %p63 = scmp.eq.s32.totalorder %s32, 1
      %p64 = por %p62, %p63
      %p65 = scmp.ne.s32.totalorder %s54, %s55
      %p66 = scmp.eq.s32.totalorder %s32, 0
      %p67 = por %p65, %p66
      %p68 = scmp.ne.s32.totalorder %s54, %s55
      %p69 = scmp.eq.s32.totalorder %s33, 1
      %p70 = por %p68, %p69
      %p72 = scmp.ne.s32.totalorder %s55, %s71
      %p73 = scmp.eq.s32.totalorder %s33, 0
      %p74 = por %p72, %p73
      %s75 = ssub.s32 %s34, %s46
      %p76 = scmp.eq.s32.totalorder %s75, 0
      %s78 = sadd.s32 %s77, 1
      %s79 = scalar_select %p76, %s77, %s78
      %p82 = pneg %p76
      %p83 = scmp.eq.s32.totalorder %s27, 1
      %p84 = por %p82, %p83
      %p85 = scmp.ne.s32.totalorder %s77, %s80
      %p86 = scmp.eq.s32.totalorder %s27, 0
      %p87 = por %p85, %p86
      %p88 = scmp.ne.s32.totalorder %s77, %s80
      %p89 = scmp.eq.s32.totalorder %s32, 1
      %p90 = por %p88, %p89
      %p91 = scmp.ne.s32.totalorder %s80, %s81
      %p92 = scmp.eq.s32.totalorder %s32, 0
      %p93 = por %p91, %p92
      %p94 = scmp.ne.s32.totalorder %s80, %s81
      %p95 = scmp.eq.s32.totalorder %s33, 1
      %p96 = por %p94, %p95
      %p98 = scmp.ne.s32.totalorder %s81, %s97
      %p99 = scmp.eq.s32.totalorder %s33, 0
      %p100 = por %p98, %p99
      %s101 = ssub.s32 %s34, %s46
      %p102 = scmp.eq.s32.totalorder %s101, 0
      %s104 = sadd.s32 %s103, 1
      %s105 = scalar_select %p102, %s103, %s104
      %p108 = pneg %p102
      %p109 = scmp.eq.s32.totalorder %s27, 1
      %p110 = por %p108, %p109
      %p111 = scmp.ne.s32.totalorder %s103, %s106
      %p112 = scmp.eq.s32.totalorder %s27, 0
      %p113 = por %p111, %p112
      %p114 = scmp.ne.s32.totalorder %s103, %s106
      %p115 = scmp.eq.s32.totalorder %s32, 1
      %p116 = por %p114, %p115
      %p117 = scmp.ne.s32.totalorder %s106, %s107
      %p118 = scmp.eq.s32.totalorder %s32, 0
      %p119 = por %p117, %p118
      %p120 = scmp.ne.s32.totalorder %s106, %s107
      %p121 = scmp.eq.s32.totalorder %s33, 1
      %p122 = por %p120, %p121
      %p124 = scmp.ne.s32.totalorder %s107, %s123
      %p125 = scmp.eq.s32.totalorder %s33, 0
      %p126 = por %p124, %p125
      %s127 = ssub.s32 %s34, %s46
      %s128 = ssub.s32 %s35, %s42
      %s129 = sor.u32 %s127, %s128
      %p130 = scmp.eq.s32.totalorder %s129, 0
      %s132 = sadd.s32 %s131, 1
      %s133 = scalar_select %p130, %s131, %s132
      %p136 = pneg %p130
      %p137 = scmp.eq.s32.totalorder %s27, 1
      %p138 = por %p136, %p137
      %p139 = scmp.ne.s32.totalorder %s131, %s134
      %p140 = scmp.eq.s32.totalorder %s27, 0
      %p141 = por %p139, %p140
      %p142 = scmp.ne.s32.totalorder %s131, %s134
      %p143 = scmp.eq.s32.totalorder %s32, 1
      %p144 = por %p142, %p143
      %p145 = scmp.ne.s32.totalorder %s134, %s135
      %p146 = scmp.eq.s32.totalorder %s32, 0
      %p147 = por %p145, %p146
      %p148 = scmp.ne.s32.totalorder %s134, %s135
      %p149 = scmp.eq.s32.totalorder %s33, 1
      %p150 = por %p148, %p149
      %p152 = scmp.ne.s32.totalorder %s135, %s151
      %p153 = scmp.eq.s32.totalorder %s33, 0
      %p154 = por %p152, %p153
      %s156 = sadd.s32 %s155, 1
      %p159 = scmp.eq.s32.totalorder %s27, 1
      %p160 = scmp.ne.s32.totalorder %s155, %s157
      %p161 = scmp.eq.s32.totalorder %s27, 0
      %p162 = por %p160, %p161
      %p163 = scmp.ne.s32.totalorder %s155, %s157
      %p164 = scmp.eq.s32.totalorder %s32, 1
      %p165 = por %p163, %p164
      %p166 = scmp.ne.s32.totalorder %s157, %s158
      %p167 = scmp.eq.s32.totalorder %s32, 0
      %p168 = por %p166, %p167
      %p169 = scmp.ne.s32.totalorder %s157, %s158
      %p170 = scmp.eq.s32.totalorder %s33, 1
      %p171 = por %p169, %p170
      %p173 = scmp.ne.s32.totalorder %s158, %s172
      %p174 = scmp.eq.s32.totalorder %s33, 0
      %p175 = por %p173, %p174
      %s177 = sadd.s32 %s176, 1
      %p180 = scmp.eq.s32.totalorder %s27, 1
      %p181 = scmp.ne.s32.totalorder %s176, %s178
      %p182 = scmp.eq.s32.totalorder %s27, 0
      %p183 = por %p181, %p182
      %p184 = scmp.ne.s32.totalorder %s176, %s178
      %p185 = scmp.eq.s32.totalorder %s32, 1
      %p186 = por %p184, %p185
      %p187 = scmp.ne.s32.totalorder %s178, %s179
      %p188 = scmp.eq.s32.totalorder %s32, 0
      %p189 = por %p187, %p188
      %p190 = scmp.ne.s32.totalorder %s178, %s179
      %p191 = scmp.eq.s32.totalorder %s33, 1
      %p192 = por %p190, %p191
      %p194 = scmp.ne.s32.totalorder %s179, %s193
      %p195 = scmp.eq.s32.totalorder %s33, 0
      %p196 = por %p194, %p195
      %s198 = sadd.s32 %s197, 1
      %p201 = scmp.eq.s32.totalorder %s27, 1
      %p202 = scmp.ne.s32.totalorder %s197, %s199
      %p203 = scmp.eq.s32.totalorder %s27, 0
      %p204 = por %p202, %p203
      %p205 = scmp.ne.s32.totalorder %s197, %s199
      %p206 = scmp.eq.s32.totalorder %s32, 1
      %p207 = por %p205, %p206
      %p208 = scmp.ne.s32.totalorder %s199, %s200
      %p209 = scmp.eq.s32.totalorder %s32, 0
      %p210 = por %p208, %p209
      %p211 = scmp.ne.s32.totalorder %s199, %s200
      %p212 = scmp.eq.s32.totalorder %s33, 1
      %p213 = por %p211, %p212
      %p215 = scmp.ne.s32.totalorder %s200, %s214
      %p216 = scmp.eq.s32.totalorder %s33, 0
      %p217 = por %p215, %p216
      %s219 = sadd.s32 %s218, 1
      %p222 = scmp.eq.s32.totalorder %s27, 1
      %p223 = scmp.ne.s32.totalorder %s218, %s220
      %p224 = scmp.eq.s32.totalorder %s27, 0
      %p225 = por %p223, %p224
      %p226 = scmp.ne.s32.totalorder %s218, %s220
      %p227 = scmp.eq.s32.totalorder %s32, 1
      %p228 = por %p226, %p227
      %p229 = scmp.ne.s32.totalorder %s220, %s221
      %p230 = scmp.eq.s32.totalorder %s32, 0
      %p231 = por %p229, %p230
      %p232 = scmp.ne.s32.totalorder %s220, %s221
      %p233 = scmp.eq.s32.totalorder %s33, 1
      %p234 = por %p232, %p233
      %p236 = scmp.ne.s32.totalorder %s221, %s235
      %p237 = scmp.eq.s32.totalorder %s33, 0
      %p238 = por %p236, %p237
      %s240 = sadd.s32 %s239, 1
      %p243 = scmp.eq.s32.totalorder %s27, 1
      %p244 = scmp.ne.s32.totalorder %s239, %s241
      %p245 = scmp.eq.s32.totalorder %s27, 0
      %p246 = por %p244, %p245
      %p247 = scmp.ne.s32.totalorder %s239, %s241
      %p248 = scmp.eq.s32.totalorder %s32, 1
      %p249 = por %p247, %p248
      %p250 = scmp.ne.s32.totalorder %s241, %s242
      %p251 = scmp.eq.s32.totalorder %s32, 0
      %p252 = por %p250, %p251
      %p253 = scmp.ne.s32.totalorder %s241, %s242
      %p254 = scmp.eq.s32.totalorder %s33, 1
      %p255 = por %p253, %p254
      %p257 = scmp.ne.s32.totalorder %s242, %s256
      %p258 = scmp.eq.s32.totalorder %s33, 0
      %p259 = por %p257, %p258
      %s261 = sadd.s32 %s260, 1
      %p264 = scmp.eq.s32.totalorder %s27, 1
      %p265 = scmp.ne.s32.totalorder %s260, %s262
      %p266 = scmp.eq.s32.totalorder %s27, 0
      %p267 = por %p265, %p266
      %p268 = scmp.ne.s32.totalorder %s260, %s262
      %p269 = scmp.eq.s32.totalorder %s32, 1
      %p270 = por %p268, %p269
      %p271 = scmp.ne.s32.totalorder %s262, %s263
      %p272 = scmp.eq.s32.totalorder %s32, 0
      %p273 = por %p271, %p272
      %p274 = scmp.ne.s32.totalorder %s262, %s263
      %p275 = scmp.eq.s32.totalorder %s33, 1
      %p276 = por %p274, %p275
      %p278 = scmp.ne.s32.totalorder %s263, %s277
      %p279 = scmp.eq.s32.totalorder %s33, 0
      %p280 = por %p278, %p279
      %s282 = sadd.s32 %s281, 1
      %p285 = scmp.eq.s32.totalorder %s27, 1
      %p286 = scmp.ne.s32.totalorder %s281, %s283
      %p287 = scmp.eq.s32.totalorder %s27, 0
      %p288 = por %p286, %p287
      %p289 = scmp.ne.s32.totalorder %s281, %s283
      %p290 = scmp.eq.s32.totalorder %s32, 1
      %p291 = por %p289, %p290
      %p292 = scmp.ne.s32.totalorder %s283, %s284
      %p293 = scmp.eq.s32.totalorder %s32, 0
      %p294 = por %p292, %p293
      %p295 = scmp.ne.s32.totalorder %s283, %s284
      %p296 = scmp.eq.s32.totalorder %s33, 1
      %p297 = por %p295, %p296
      %p299 = scmp.ne.s32.totalorder %s284, %s298
      %p300 = scmp.eq.s32.totalorder %s33, 0
      %p301 = por %p299, %p300
      %s303 = sadd.s32 %s302, 1
      %p306 = scmp.eq.s32.totalorder %s27, 1
      %p307 = scmp.ne.s32.totalorder %s302, %s304
      %p308 = scmp.eq.s32.totalorder %s27, 0
      %p309 = por %p307, %p308
      %p310 = scmp.ne.s32.totalorder %s302, %s304
      %p311 = scmp.eq.s32.totalorder %s32, 1
      %p312 = por %p310, %p311
      %p313 = scmp.ne.s32.totalorder %s304, %s305
      %p314 = scmp.eq.s32.totalorder %s32, 0
      %p315 = por %p313, %p314
      %p316 = scmp.ne.s32.totalorder %s304, %s305
      %p317 = scmp.eq.s32.totalorder %s33, 1
      %p318 = por %p316, %p317
      %p320 = scmp.ne.s32.totalorder %s305, %s319
      %p321 = scmp.eq.s32.totalorder %s33, 0
      %p322 = por %p320, %p321
      %s323 = ssub.s32 %s34, %s46
      %s324 = ssub.s32 %s35, %s42
      %s325 = sor.u32 %s323, %s324
      %p326 = scmp.eq.s32.totalorder %s325, 0
      %s328 = sadd.s32 %s327, 1
      %s329 = scalar_select %p326, %s327, %s328
      %p332 = pneg %p326
      %p333 = scmp.eq.s32.totalorder %s27, 1
      %p334 = por %p332, %p333
      %p335 = scmp.ne.s32.totalorder %s327, %s330
      %p336 = scmp.eq.s32.totalorder %s27, 0
      %p337 = por %p335, %p336
      %p338 = scmp.ne.s32.totalorder %s327, %s330
      %p339 = scmp.eq.s32.totalorder %s32, 1
      %p340 = por %p338, %p339
      %p341 = scmp.ne.s32.totalorder %s330, %s331
      %p342 = scmp.eq.s32.totalorder %s32, 0
      %p343 = por %p341, %p342
      %p344 = scmp.ne.s32.totalorder %s330, %s331
      %p345 = scmp.eq.s32.totalorder %s33, 1
      %p346 = por %p344, %p345
      %p348 = scmp.ne.s32.totalorder %s331, %s347
      %p349 = scmp.eq.s32.totalorder %s33, 0
      %p350 = por %p348, %p349
      %p351 = scmp.le.s32.totalorder 1, %s27
      %p352 = scmp.lt.s32.totalorder %s27, 3
      %p353 = pnand %p351, %p352
      %p354 = pneg %p353
      // Predicated region
      $region9: #{tpu_custom_call.1} parent=5 // pred_check
        _
      $region10: #{tpu_custom_call.1} parent=5 // pred_check_branch
        %356 = sbr.rel (%p353) target = $region12
      $region11: #{tpu_custom_call.1} parent=5 // pred_region
        %s357 = ssub.s32 %s27, 1
        // Predicated region
        $region13: #{tpu_custom_call.1} parent=11 // pred_check
          %p358 = pneg %p168
        $region14: #{tpu_custom_call.1} parent=11 // pred_check_branch
          %360 = sbr.rel (%p358) target = $region16
        $region15: #{tpu_custom_call.1} parent=11 // pred_region
          _
        $region16: #{tpu_custom_call.1} parent=11 // pred_fallthru
          _
        // Predicated region
        $region17: #{tpu_custom_call.1} parent=11 // pred_check
          %p361 = pneg %p189
        $region18: #{tpu_custom_call.1} parent=11 // pred_check_branch
          %363 = sbr.rel (%p361) target = $region20
        $region19: #{tpu_custom_call.1} parent=11 // pred_region
          _
        $region20: #{tpu_custom_call.1} parent=11 // pred_fallthru
          _
        // Predicated region
        $region21: #{tpu_custom_call.1} parent=11 // pred_check
          %p364 = pneg %p210
        $region22: #{tpu_custom_call.1} parent=11 // pred_check_branch
          %366 = sbr.rel (%p364) target = $region24
        $region23: #{tpu_custom_call.1} parent=11 // pred_region
          _
        $region24: #{tpu_custom_call.1} parent=11 // pred_fallthru
          _
        // Predicated region
        $region25: #{tpu_custom_call.1} parent=11 // pred_check
          %p367 = pneg %p231
        $region26: #{tpu_custom_call.1} parent=11 // pred_check_branch
          %369 = sbr.rel (%p367) target = $region28
        $region27: #{tpu_custom_call.1} parent=11 // pred_region
          _
        $region28: #{tpu_custom_call.1} parent=11 // pred_fallthru
          _
        // Predicated region
        $region29: #{tpu_custom_call.1} parent=11 // pred_check
          %p370 = pneg %p252
        $region30: #{tpu_custom_call.1} parent=11 // pred_check_branch
          %372 = sbr.rel (%p370) target = $region32
        $region31: #{tpu_custom_call.1} parent=11 // pred_region
          _
        $region32: #{tpu_custom_call.1} parent=11 // pred_fallthru
          _
        // Predicated region
        $region33: #{tpu_custom_call.1} parent=11 // pred_check
          %p373 = pneg %p273
        $region34: #{tpu_custom_call.1} parent=11 // pred_check_branch
          %375 = sbr.rel (%p373) target = $region36
        $region35: #{tpu_custom_call.1} parent=11 // pred_region
          _
        $region36: #{tpu_custom_call.1} parent=11 // pred_fallthru
          _
        // Predicated region
        $region37: #{tpu_custom_call.1} parent=11 // pred_check
          %p376 = pneg %p294
        $region38: #{tpu_custom_call.1} parent=11 // pred_check_branch
          %378 = sbr.rel (%p376) target = $region40
        $region39: #{tpu_custom_call.1} parent=11 // pred_region
          _
        $region40: #{tpu_custom_call.1} parent=11 // pred_fallthru
          _
        // Predicated region
        $region41: #{tpu_custom_call.1} parent=11 // pred_check
          %p379 = pneg %p315
        $region42: #{tpu_custom_call.1} parent=11 // pred_check_branch
          %381 = sbr.rel (%p379) target = $region44
        $region43: #{tpu_custom_call.1} parent=11 // pred_region
          _
        $region44: #{tpu_custom_call.1} parent=11 // pred_fallthru
          _
      $region12: #{tpu_custom_call.1} parent=5 // pred_fallthru
        _
      %p382 = scmp.lt.s32.totalorder %s27, 2
      // Predicated region
      $region45: #{tpu_custom_call.1} parent=5 // pred_check
        %p383 = pneg %p382
      $region46: #{tpu_custom_call.1} parent=5 // pred_check_branch
        %385 = sbr.rel (%p383) target = $region48
      $region47: #{tpu_custom_call.1} parent=5 // pred_region
        // Predicated region
        $region49: #{tpu_custom_call.1} parent=47 // pred_check
          %p386 = pneg %p61
        $region50: #{tpu_custom_call.1} parent=47 // pred_check_branch
          %388 = sbr.rel (%p386) target = $region52
        $region51: #{tpu_custom_call.1} parent=47 // pred_region
          %s389 = sand.u32 %s51, 1
          %s390 = scalar_lea.sflag [#allocation3], %s389
          %s391 = sand.u32 %s51, 1
          %s392 = smul.addr %s391, 8
          %s393 = scalar_lea.vmem [#allocation2], %s392
          %s395 = ssub.s32 128, 128
          %396 = vsyncadd %s390, %s395
          %s397 = sadd.s32 %s35, %s34
          %s398 = smul.addr %s397, 128
          %s399 = scalar_lea.hbm %s0, %s398
          %s401 = sshll.u32 %s393, 4
          %s402 = int_to_ptr.vmem [resolvable:$true] %s401
          %404 = dma.hbm_to_vmem [thread:$0]  %s399, 128, %s402, %s390
        $region52: #{tpu_custom_call.1} parent=47 // pred_fallthru
          _
        // Predicated region
        $region53: #{tpu_custom_call.1} parent=47 // pred_check
          %p405 = pneg %p87
        $region54: #{tpu_custom_call.1} parent=47 // pred_check_branch
          %407 = sbr.rel (%p405) target = $region56
        $region55: #{tpu_custom_call.1} parent=47 // pred_region
          %p408 = scmp.lt.s32.totalorder %s34, 1
          %s409 = scalar_select %p408, %s34, 1
          %s410 = smul.addr %s409, 4
          %s411 = smul.addr %s410, 8
          %s412 = scalar_lea.vmem %s1, %s411
        $region56: #{tpu_custom_call.1} parent=47 // pred_fallthru
          _
        // Predicated region
        $region57: #{tpu_custom_call.1} parent=47 // pred_check
          %p413 = pneg %p113
        $region58: #{tpu_custom_call.1} parent=47 // pred_check_branch
          %415 = sbr.rel (%p413) target = $region60
        $region59: #{tpu_custom_call.1} parent=47 // pred_region
          %s416 = sand.u32 %s103, 1
          %s417 = scalar_lea.sflag [#allocation6], %s416
          %s418 = sand.u32 %s103, 1
          %s419 = smul.addr %s418, 8
          %s420 = scalar_lea.vmem [#allocation5], %s419
          %s422 = ssub.s32 128, 128
          %423 = vsyncadd %s417, %s422
          %s424 = smul.addr %s34, 128
          %s425 = scalar_lea.hbm %s2, %s424
          %s427 = sshll.u32 %s420, 4
          %s428 = int_to_ptr.vmem [resolvable:$true] %s427
          %430 = dma.hbm_to_vmem [thread:$0]  %s425, 128, %s428, %s417
        $region60: #{tpu_custom_call.1} parent=47 // pred_fallthru
          _
        // Predicated region
        $region61: #{tpu_custom_call.1} parent=47 // pred_check
          %p431 = pneg %p141
        $region62: #{tpu_custom_call.1} parent=47 // pred_check_branch
          %433 = sbr.rel (%p431) target = $region64
        $region63: #{tpu_custom_call.1} parent=47 // pred_region
          %p434 = scmp.lt.s32.totalorder %s34, 1
          %s435 = scalar_select %p434, %s34, 1
          %p436 = scmp.lt.s32.totalorder %s35, 0
          %s437 = scalar_select %p436, %s35, 0
          %s438 = smul.addr %s435, 4
          %s439 = sadd.s32 %s437, %s438
          %s440 = smul.addr %s439, 8
          %s441 = scalar_lea.vmem %s3, %s440
        $region64: #{tpu_custom_call.1} parent=47 // pred_fallthru
          _
      $region48: #{tpu_custom_call.1} parent=5 // pred_fallthru
        _
      %p442 = scmp.le.s32.totalorder 1, %s27
      %p443 = scmp.lt.s32.totalorder %s27, 3
      %p444 = pnand %p442, %p443
      %p445 = pneg %p444
      // Predicated region
      $region65: #{tpu_custom_call.1} parent=5 // pred_check
        _
      $region66: #{tpu_custom_call.1} parent=5 // pred_check_branch
        %447 = sbr.rel (%p444) target = $region68
      $region67: #{tpu_custom_call.1} parent=5 // pred_region
        %s448 = ssub.s32 %s27, 1
        %s449 = sand.u32 %s54, 1
        %s450 = scalar_lea.sflag [#allocation3], %s449
        %s451 = sand.u32 %s54, 1
        %s452 = smul.addr %s451, 8
        %s453 = scalar_lea.vmem [#allocation2], %s452
        // Predicated region
        $region69: #{tpu_custom_call.1} parent=67 // pred_check
          %p454 = pneg %p67
        $region70: #{tpu_custom_call.1} parent=67 // pred_check_branch
          %456 = sbr.rel (%p454) target = $region72
        $region71: #{tpu_custom_call.1} parent=67 // pred_region
          %457 = dma.done %s450, 128
        $region72: #{tpu_custom_call.1} parent=67 // pred_fallthru
          _
        %s458 = sand.u32 %s106, 1
        %s459 = scalar_lea.sflag [#allocation6], %s458
        %s460 = sand.u32 %s106, 1
        %s461 = smul.addr %s460, 8
        %s462 = scalar_lea.vmem [#allocation5], %s461
        // Predicated region
        $region73: #{tpu_custom_call.1} parent=67 // pred_check
          %p463 = pneg %p119
        $region74: #{tpu_custom_call.1} parent=67 // pred_check_branch
          %465 = sbr.rel (%p463) target = $region76
        $region75: #{tpu_custom_call.1} parent=67 // pred_region
          %466 = dma.done %s459, 128
        $region76: #{tpu_custom_call.1} parent=67 // pred_fallthru
          _
        %s467 = sand.u32 %s54, 1
        %s468 = scalar_lea.sflag [#allocation3], %s467
        %s469 = sand.u32 %s54, 1
        %s470 = smul.addr %s469, 8
        %s471 = scalar_lea.vmem [#allocation2], %s470
        %p472 = pneg %p67
        %p473 = pneg %p64
        %p474 = scmp.lt.s32.totalorder %s36, 1
        %s475 = scalar_select %p474, %s36, 1
        %s476 = smul.addr %s475, 4
        %s477 = smul.addr %s476, 8
        %s478 = scalar_lea.vmem %s1, %s477
        %p479 = pneg %p93
        %p480 = pneg %p90
        %s481 = sand.u32 %s106, 1
        %s482 = scalar_lea.sflag [#allocation6], %s481
        %s483 = sand.u32 %s106, 1
        %s484 = smul.addr %s483, 8
        %s485 = scalar_lea.vmem [#allocation5], %s484
        %p486 = pneg %p119
        %p487 = pneg %p116
        %p488 = scmp.lt.s32.totalorder %s36, 1
        %s489 = scalar_select %p488, %s36, 1
        %p490 = scmp.lt.s32.totalorder %s37, 0
        %s491 = scalar_select %p490, %s37, 0
        %s492 = smul.addr %s489, 4
        %s493 = sadd.s32 %s491, %s492
        %s494 = smul.addr %s493, 8
        %s495 = scalar_lea.vmem %s3, %s494
        %p496 = pneg %p147
        %p497 = pneg %p144
        %p498 = pneg %p168
        %p499 = pneg %p165
        %p500 = pneg %p189
        %p501 = pneg %p186
        %p502 = pneg %p210
        %p503 = pneg %p207
        %p504 = pneg %p231
        %p505 = pneg %p228
        %p506 = pneg %p252
        %p507 = pneg %p249
        %p508 = pneg %p273
        %p509 = pneg %p270
        %p510 = pneg %p294
        %p511 = pneg %p291
        %p512 = pneg %p315
        %p513 = pneg %p312
        %p514 = pneg %p343
        %p515 = pneg %p340
        %s516 = sand.u32 %s330, 1
        %s517 = scalar_lea.sflag [#allocation4], %s516
        %s518 = sand.u32 %s330, 1
        %s519 = smul.addr %s518, 8
        %s520 = scalar_lea.vmem [#allocation7], %s519
        %p521 = scmp.lt.s32.totalorder %s36, 1
        %s522 = scalar_select %p521, %s36, 1
        %s523 = smul.addr %s522, 4
        %s524 = smul.addr %s523, 8
        %s525 = scalar_lea.vmem %s1, %s524
        %p526 = scmp.lt.s32.totalorder %s36, 1
        %s527 = scalar_select %p526, %s36, 1
        %p528 = scmp.lt.s32.totalorder %s37, 0
        %s529 = scalar_select %p528, %s37, 0
        %s530 = smul.addr %s527, 4
        %s531 = sadd.s32 %s529, %s530
        %s532 = smul.addr %s531, 8
        %s533 = scalar_lea.vmem %s3, %s532
        %v534 = vld [vmem:[%s453] sm:$0xff]
        %v535 = vld [vmem:[%s525] sm:$0xff]
        %v536 = vld [vmem:[%s525 + $0x8] sm:$0xff]
        %v537 = vld [vmem:[%s525 + $0x10] sm:$0xff]
        %v538 = vld [vmem:[%s525 + $0x18] sm:$0xff]
        %v539 = vld [vmem:[%s462] sm:$0xff]
        %v540 = vld [vmem:[%s4] sm:$0xff]
        %v541 = vld [vmem:[%s5] sm:$0xff]
        %543 = vset.pattern.permute.xlu0 0
        %544 = vperm.xlu0 %543, %v541
        %v545 = vpop.permute.xlu0 %544
        %vm547 = vcmask 261120
        %v549 = vsel %vm547, %v540, 0
        %551 = vmatprep.subr.mxu0 0.0
        %552 = vmatpush1.msra.mxu0 %v535
        %553 = vmatprep.subr.mxu0 0.0
        %554 = vmatpush1.msra.mxu0 %v536
        %555 = vmatprep.subr.mxu0 0.0
        %556 = vmatpush1.msra.mxu0 %v537
        %557 = vmatprep.subr.mxu0 0.0
        %558 = vmatpush1.msra.mxu0 %v538
        %559 = vmatprep.subr.mxu0 0.0
        %560 = vmatpush1.msra.mxu0 0.0
        %561 = vmatprep.subr.mxu0 0.0
        %562 = vmatpush1.msra.mxu0 0.0
        %563 = vmatprep.subr.mxu0 0.0
        %564 = vmatpush1.msra.mxu0 0.0
        %565 = vmatprep.subr.mxu0 0.0
        %566 = vmatpush1.msra.mxu0 0.0
        %567 = vmatprep.subr.mxu0 0.0
        %568 = vmatpush1.msra.mxu0 0.0
        %569 = vmatprep.subr.mxu0 0.0
        %570 = vmatpush1.msra.mxu0 0.0
        %571 = vmatprep.subr.mxu0 0.0
        %572 = vmatpush1.msra.mxu0 0.0
        %573 = vmatprep.subr.mxu0 0.0
        %574 = vmatpush1.msra.mxu0 0.0
        %575 = vmatprep.subr.mxu0 0.0
        %576 = vmatpush1.msra.mxu0 0.0
        %577 = vmatprep.subr.mxu0 0.0
        %578 = vmatpush1.msra.mxu0 0.0
        %579 = vmatprep.subr.mxu0 0.0
        %580 = vmatpush1.msra.mxu0 0.0
        %581 = vmatprep.subr.mxu0 0.0
        %582 = vmatpush1.msra.mxu0 0.0
        %583 = vmatprep.subr.mxu0 0.0
        %584 = vmatpush1.msra.mxu0 0.0
        %585 = vmatprep.subr.mxu0 0.0
        %586 = vmatpush1.msra.mxu0 0.0
        %587 = vmatprep.subr.mxu0 0.0
        %588 = vmatpush1.msra.mxu0 0.0
        %589 = vmatprep.subr.mxu0 0.0
        %590 = vmatpush1.msra.mxu0 0.0
        %591 = vmatprep.subr.mxu0 0.0
        %592 = vmatpush1.msra.mxu0 0.0
        %593 = vmatprep.subr.mxu0 0.0
        %594 = vmatpush1.msra.mxu0 0.0
        %595 = vmatprep.subr.mxu0 0.0
        %596 = vmatpush1.msra.mxu0 0.0
        %597 = vmatprep.subr.mxu0 0.0
        %598 = vmatpush1.msra.mxu0 0.0
        %599 = vmatprep.subr.mxu0 0.0
        %600 = vmatpush1.msra.mxu0 0.0
        %601 = vmatprep.subr.mxu0 0.0
        %602 = vmatpush1.msra.mxu0 0.0
        %603 = vmatprep.subr.mxu0 0.0
        %604 = vmatpush1.msra.mxu0 0.0
        %605 = vmatprep.subr.mxu0 0.0
        %606 = vmatpush1.msra.mxu0 0.0
        %607 = vmatprep.subr.mxu0 0.0
        %608 = vmatpush1.msra.mxu0 0.0
        %609 = vmatprep.subr.mxu0 0.0
        %610 = vmatpush1.msra.mxu0 0.0
        %611 = vmatprep.subr.mxu0 0.0
        %612 = vmatpush1.msra.mxu0 0.0
        %613 = vmatprep.subr.mxu0 0.0
        %614 = vmatpush1.msra.mxu0 0.0
        %615 = vmatprep.mubr.f32.mxu0 0.0
        %616 = vmatmul.mubr.f32.gmra.mrb[0].mxu0 %v549
        %v617 = vpop.f32.mrb[0].mxu0
        %v618 = vadd.f32 %v545, %v617
        %v619 = vpop.f32.mrb[0].mxu0
        %620 = vdwg.mxu0
        %v621 = vld [vmem:[%s6] sm:$0xff]
        %v622 = vld [vmem:[%s6 + $0x8] sm:$0xff]
        %v623 = vld [vmem:[%s6 + $0x10] sm:$0xff]
        %v624 = vld [vmem:[%s6 + $0x18] sm:$0xff]
        %v625 = vld [vmem:[%s7] sm:$0x1]
        %v627 = vlaneseq
        %v628 = vshrl.u32 %v627, 7
        %v629 = vsub.s32 0, %v628
        %v630 = vrot.slane %v625, %v629
        %v633 = vsel %vm547, %v534, 0
        %635 = vmatprep.subr.mxu0 0.0
        %636 = vmatpush1.msra.mxu0 %v621
        %637 = vmatprep.subr.mxu0 0.0
        %638 = vmatpush1.msra.mxu0 %v622
        %639 = vmatprep.subr.mxu0 0.0
        %640 = vmatpush1.msra.mxu0 %v623
        %641 = vmatprep.subr.mxu0 0.0
        %642 = vmatpush1.msra.mxu0 %v624
        %643 = vmatprep.subr.mxu0 0.0
        %644 = vmatpush1.msra.mxu0 0.0
        %645 = vmatprep.subr.mxu0 0.0
        %646 = vmatpush1.msra.mxu0 0.0
        %647 = vmatprep.subr.mxu0 0.0
        %648 = vmatpush1.msra.mxu0 0.0
        %649 = vmatprep.subr.mxu0 0.0
        %650 = vmatpush1.msra.mxu0 0.0
        %651 = vmatprep.subr.mxu0 0.0
        %652 = vmatpush1.msra.mxu0 0.0
        %653 = vmatprep.subr.mxu0 0.0
        %654 = vmatpush1.msra.mxu0 0.0
        %655 = vmatprep.subr.mxu0 0.0
        %656 = vmatpush1.msra.mxu0 0.0
        %657 = vmatprep.subr.mxu0 0.0
        %658 = vmatpush1.msra.mxu0 0.0
        %659 = vmatprep.subr.mxu0 0.0
        %660 = vmatpush1.msra.mxu0 0.0
        %661 = vmatprep.subr.mxu0 0.0
        %662 = vmatpush1.msra.mxu0 0.0
        %663 = vmatprep.subr.mxu0 0.0
        %664 = vmatpush1.msra.mxu0 0.0
        %665 = vmatprep.subr.mxu0 0.0
        %666 = vmatpush1.msra.mxu0 0.0
        %667 = vmatprep.subr.mxu0 0.0
        %668 = vmatpush1.msra.mxu0 0.0
        %669 = vmatprep.subr.mxu0 0.0
        %670 = vmatpush1.msra.mxu0 0.0
        %671 = vmatprep.subr.mxu0 0.0
        %672 = vmatpush1.msra.mxu0 0.0
        %673 = vmatprep.subr.mxu0 0.0
        %674 = vmatpush1.msra.mxu0 0.0
        %675 = vmatprep.subr.mxu0 0.0
        %676 = vmatpush1.msra.mxu0 0.0
        %677 = vmatprep.subr.mxu0 0.0
        %678 = vmatpush1.msra.mxu0 0.0
        %679 = vmatprep.subr.mxu0 0.0
        %680 = vmatpush1.msra.mxu0 0.0
        %681 = vmatprep.subr.mxu0 0.0
        %682 = vmatpush1.msra.mxu0 0.0
        %683 = vmatprep.subr.mxu0 0.0
        %684 = vmatpush1.msra.mxu0 0.0
        %685 = vmatprep.subr.mxu0 0.0
        %686 = vmatpush1.msra.mxu0 0.0
        %687 = vmatprep.subr.mxu0 0.0
        %688 = vmatpush1.msra.mxu0 0.0
        %689 = vmatprep.subr.mxu0 0.0
        %690 = vmatpush1.msra.mxu0 0.0
        %691 = vmatprep.subr.mxu0 0.0
        %692 = vmatpush1.msra.mxu0 0.0
        %693 = vmatprep.subr.mxu0 0.0
        %694 = vmatpush1.msra.mxu0 0.0
        %695 = vmatprep.subr.mxu0 0.0
        %696 = vmatpush1.msra.mxu0 0.0
        %697 = vmatprep.subr.mxu0 0.0
        %698 = vmatpush1.msra.mxu0 0.0
        %699 = vmatprep.mubr.f32.mxu0 0.0
        %700 = vmatmul.mubr.f32.gmra.mrb[0].mxu0 %v633
        %v701 = vpop.f32.mrb[0].mxu0
        %v702 = vadd.f32 %v630, %v701
        %v703 = vpop.f32.mrb[0].mxu0
        %704 = vdwg.mxu0
        %v705 = vld [vmem:[%s8] sm:$0xff]
        %v706 = vld [vmem:[%s8 + $0x8] sm:$0xff]
        %v707 = vld [vmem:[%s8 + $0x10] sm:$0xff]
        %v708 = vld [vmem:[%s8 + $0x18] sm:$0xff]
        %v709 = vld [vmem:[%s9] sm:$0x1]
        %v711 = vlaneseq
        %v712 = vshrl.u32 %v711, 7
        %v713 = vsub.s32 0, %v712
        %v714 = vrot.slane %v709, %v713
        %v717 = vsel %vm547, %v539, 0
        %719 = vmatprep.subr.mxu0 0.0
        %720 = vmatpush1.msra.mxu0 %v705
        %721 = vmatprep.subr.mxu0 0.0
        %722 = vmatpush1.msra.mxu0 %v706
        %723 = vmatprep.subr.mxu0 0.0
        %724 = vmatpush1.msra.mxu0 %v707
        %725 = vmatprep.subr.mxu0 0.0
        %726 = vmatpush1.msra.mxu0 %v708
        %727 = vmatprep.subr.mxu0 0.0
        %728 = vmatpush1.msra.mxu0 0.0
        %729 = vmatprep.subr.mxu0 0.0
        %730 = vmatpush1.msra.mxu0 0.0
        %731 = vmatprep.subr.mxu0 0.0
        %732 = vmatpush1.msra.mxu0 0.0
        %733 = vmatprep.subr.mxu0 0.0
        %734 = vmatpush1.msra.mxu0 0.0
        %735 = vmatprep.subr.mxu0 0.0
        %736 = vmatpush1.msra.mxu0 0.0
        %737 = vmatprep.subr.mxu0 0.0
        %738 = vmatpush1.msra.mxu0 0.0
        %739 = vmatprep.subr.mxu0 0.0
        %740 = vmatpush1.msra.mxu0 0.0
        %741 = vmatprep.subr.mxu0 0.0
        %742 = vmatpush1.msra.mxu0 0.0
        %743 = vmatprep.subr.mxu0 0.0
        %744 = vmatpush1.msra.mxu0 0.0
        %745 = vmatprep.subr.mxu0 0.0
        %746 = vmatpush1.msra.mxu0 0.0
        %747 = vmatprep.subr.mxu0 0.0
        %748 = vmatpush1.msra.mxu0 0.0
        %749 = vmatprep.subr.mxu0 0.0
        %750 = vmatpush1.msra.mxu0 0.0
        %751 = vmatprep.subr.mxu0 0.0
        %752 = vmatpush1.msra.mxu0 0.0
        %753 = vmatprep.subr.mxu0 0.0
        %754 = vmatpush1.msra.mxu0 0.0
        %755 = vmatprep.subr.mxu0 0.0
        %756 = vmatpush1.msra.mxu0 0.0
        %757 = vmatprep.subr.mxu0 0.0
        %758 = vmatpush1.msra.mxu0 0.0
        %759 = vmatprep.subr.mxu0 0.0
        %760 = vmatpush1.msra.mxu0 0.0
        %761 = vmatprep.subr.mxu0 0.0
        %762 = vmatpush1.msra.mxu0 0.0
        %763 = vmatprep.subr.mxu0 0.0
        %764 = vmatpush1.msra.mxu0 0.0
        %765 = vmatprep.subr.mxu0 0.0
        %766 = vmatpush1.msra.mxu0 0.0
        %767 = vmatprep.subr.mxu0 0.0
        %768 = vmatpush1.msra.mxu0 0.0
        %769 = vmatprep.subr.mxu0 0.0
        %770 = vmatpush1.msra.mxu0 0.0
        %771 = vmatprep.subr.mxu0 0.0
        %772 = vmatpush1.msra.mxu0 0.0
        %773 = vmatprep.subr.mxu0 0.0
        %774 = vmatpush1.msra.mxu0 0.0
        %775 = vmatprep.subr.mxu0 0.0
        %776 = vmatpush1.msra.mxu0 0.0
        %777 = vmatprep.subr.mxu0 0.0
        %778 = vmatpush1.msra.mxu0 0.0
        %779 = vmatprep.subr.mxu0 0.0
        %780 = vmatpush1.msra.mxu0 0.0
        %781 = vmatprep.subr.mxu0 0.0
        %782 = vmatpush1.msra.mxu0 0.0
        %783 = vmatprep.mubr.f32.mxu0 0.0
        %784 = vmatmul.mubr.f32.gmra.mrb[0].mxu0 %v717
        %v785 = vpop.f32.mrb[0].mxu0
        %v786 = vadd.f32 %v714, %v785
        %v787 = vpop.f32.mrb[0].mxu0
        %788 = vdwg.mxu0
        %v789 = vld [vmem:[%s533] sm:$0xff]
        %s790 = scalar_lea.vmem %s533, 8
        %v791 = vld [vmem:[%s790] sm:$0xff]
        %s792 = scalar_lea.vmem %s533, 16
        %v793 = vld [vmem:[%s792] sm:$0xff]
        %s794 = scalar_lea.vmem %s533, 24
        %v795 = vld [vmem:[%s794] sm:$0xff]
        %v796 = vlaneseq
        %v797 = vshrl.u32 %v796, 7
        %v798 = vsub.s32 0, %v797
        %v799 = vrot.slane %v618, %v798
        %801 = vset.pattern.permute.xlu0 0
        %802 = vperm.xlu0 %801, %v702
        %v803 = vpop.permute.xlu0 %802
        %v805 = vadd.f32 %v799, %v803
        %v806 = vmul.f32 %v789, %v805
        %v807 = vlaneseq
        %v808 = vshrl.u32 %v807, 7
        %v809 = vsub.s32 1, %v808
        %v810 = vrot.slane %v618, %v809
        %811 = vset.pattern.permute.xlu0 1
        %812 = vperm.xlu0 %811, %v702
        %v813 = vpop.permute.xlu0 %812
        %v815 = vadd.f32 %v810, %v813
        %v816 = vmul.f32 %v791, %v815
        %v817 = vadd.f32 %v806, %v816
        %v818 = vlaneseq
        %v819 = vshrl.u32 %v818, 7
        %v820 = vsub.s32 2, %v819
        %v821 = vrot.slane %v618, %v820
        %822 = vset.pattern.permute.xlu0 2
        %823 = vperm.xlu0 %822, %v702
        %v824 = vpop.permute.xlu0 %823
        %v826 = vadd.f32 %v821, %v824
        %v827 = vmul.f32 %v793, %v826
        %v828 = vadd.f32 %v817, %v827
        %v829 = vlaneseq
        %v830 = vshrl.u32 %v829, 7
        %v831 = vsub.s32 3, %v830
        %v832 = vrot.slane %v618, %v831
        %833 = vset.pattern.permute.xlu0 3
        %834 = vperm.xlu0 %833, %v702
        %v835 = vpop.permute.xlu0 %834
        %v837 = vadd.f32 %v832, %v835
        %v838 = vmul.f32 %v795, %v837
        %v839 = vadd.f32 %v828, %v838
        %vm840 = vcmask 64512
        %v841 = vsel %vm840, %v839, -inf
        %842 = vmax.xlane.f32.xlu0 %v841
        %v843 = vpop.xlane.xlu0 %842
        %v844 = vsub.f32 %v839, %v843
        %v845 = vmul.f32 %v844, 1.442695
        %v846 = vpow.pop %v845
        %v847 = vsel %vm840, %v846, 0.0
        %848 = vadd.xlane.f32.xlu0 %v847
        %v849 = vpop.xlane.xlu0 %848
        %v850 = vrcp.pop %v849
        %v851 = vmul.f32 %v846, %v850
        %v853 = vsel %vm840, %v851, 0
        %855 = vmatprep.subr.mxu0 0.0
        %856 = vmatpush1.msra.mxu0 %v786
        %857 = vmatprep.subr.mxu0 0.0
        %858 = vmatpush1.msra.mxu0 0.0
        %859 = vmatprep.subr.mxu0 0.0
        %860 = vmatpush1.msra.mxu0 0.0
        %861 = vmatprep.subr.mxu0 0.0
        %862 = vmatpush1.msra.mxu0 0.0
        %863 = vmatprep.subr.mxu0 0.0
        %864 = vmatpush1.msra.mxu0 0.0
        %865 = vmatprep.subr.mxu0 0.0
        %866 = vmatpush1.msra.mxu0 0.0
        %867 = vmatprep.subr.mxu0 0.0
        %868 = vmatpush1.msra.mxu0 0.0
        %869 = vmatprep.subr.mxu0 0.0
        %870 = vmatpush1.msra.mxu0 0.0
        %871 = vmatprep.subr.mxu0 0.0
        %872 = vmatpush1.msra.mxu0 0.0
        %873 = vmatprep.subr.mxu0 0.0
        %874 = vmatpush1.msra.mxu0 0.0
        %875 = vmatprep.subr.mxu0 0.0
        %876 = vmatpush1.msra.mxu0 0.0
        %877 = vmatprep.subr.mxu0 0.0
        %878 = vmatpush1.msra.mxu0 0.0
        %879 = vmatprep.subr.mxu0 0.0
        %880 = vmatpush1.msra.mxu0 0.0
        %881 = vmatprep.subr.mxu0 0.0
        %882 = vmatpush1.msra.mxu0 0.0
        %883 = vmatprep.subr.mxu0 0.0
        %884 = vmatpush1.msra.mxu0 0.0
        %885 = vmatprep.subr.mxu0 0.0
        %886 = vmatpush1.msra.mxu0 0.0
        %887 = vmatprep.subr.mxu0 0.0
        %888 = vmatpush1.msra.mxu0 0.0
        %889 = vmatprep.subr.mxu0 0.0
        %890 = vmatpush1.msra.mxu0 0.0
        %891 = vmatprep.subr.mxu0 0.0
        %892 = vmatpush1.msra.mxu0 0.0
        %893 = vmatprep.subr.mxu0 0.0
        %894 = vmatpush1.msra.mxu0 0.0
        %895 = vmatprep.subr.mxu0 0.0
        %896 = vmatpush1.msra.mxu0 0.0
        %897 = vmatprep.subr.mxu0 0.0
        %898 = vmatpush1.msra.mxu0 0.0
        %899 = vmatprep.subr.mxu0 0.0
        %900 = vmatpush1.msra.mxu0 0.0
        %901 = vmatprep.subr.mxu0 0.0
        %902 = vmatpush1.msra.mxu0 0.0
        %903 = vmatprep.subr.mxu0 0.0
        %904 = vmatpush1.msra.mxu0 0.0
        %905 = vmatprep.subr.mxu0 0.0
        %906 = vmatpush1.msra.mxu0 0.0
        %907 = vmatprep.subr.mxu0 0.0
        %908 = vmatpush1.msra.mxu0 0.0
        %909 = vmatprep.subr.mxu0 0.0
        %910 = vmatpush1.msra.mxu0 0.0
        %911 = vmatprep.subr.mxu0 0.0
        %912 = vmatpush1.msra.mxu0 0.0
        %913 = vmatprep.subr.mxu0 0.0
        %914 = vmatpush1.msra.mxu0 0.0
        %915 = vmatprep.subr.mxu0 0.0
        %916 = vmatpush1.msra.mxu0 0.0
        %917 = vmatprep.subr.mxu0 0.0
        %918 = vmatpush1.msra.mxu0 0.0
        %919 = vmatprep.mubr.f32.mxu0 0.0
        %920 = vmatmul.mubr.f32.gmra.mrb[0].mxu0 %v853
        %v921 = vpop.f32.mrb[0].mxu0
        %v922 = vadd.f32 0.0, %v921
        %v923 = vpop.f32.mrb[0].mxu0
        %924 = vdwg.mxu0
        %v925 = vlaneseq
        %v926 = vshrl.u32 %v925, 7
        %v927 = vsub.s32 4, %v926
        %v928 = vrot.slane %v618, %v927
        %929 = vset.pattern.permute.xlu0 4
        %930 = vperm.xlu0 %929, %v702
        %v931 = vpop.permute.xlu0 %930
        %v933 = vadd.f32 %v928, %v931
        %v934 = vmul.f32 %v789, %v933
        %v935 = vlaneseq
        %v936 = vshrl.u32 %v935, 7
        %v937 = vsub.s32 5, %v936
        %v938 = vrot.slane %v618, %v937
        %939 = vset.pattern.permute.xlu0 5
        %940 = vperm.xlu0 %939, %v702
        %v941 = vpop.permute.xlu0 %940
        %v943 = vadd.f32 %v938, %v941
        %v944 = vmul.f32 %v791, %v943
        %v945 = vadd.f32 %v934, %v944
        %v946 = vlaneseq
        %v947 = vshrl.u32 %v946, 7
        %v948 = vsub.s32 6, %v947
        %v949 = vrot.slane %v618, %v948
        %950 = vset.pattern.permute.xlu0 6
        %951 = vperm.xlu0 %950, %v702
        %v952 = vpop.permute.xlu0 %951
        %v954 = vadd.f32 %v949, %v952
        %v955 = vmul.f32 %v793, %v954
        %v956 = vadd.f32 %v945, %v955
        %v957 = vlaneseq
        %v958 = vshrl.u32 %v957, 7
        %v959 = vsub.s32 7, %v958
        %v960 = vrot.slane %v618, %v959
        %961 = vset.pattern.permute.xlu0 7
        %962 = vperm.xlu0 %961, %v702
        %v963 = vpop.permute.xlu0 %962
        %v965 = vadd.f32 %v960, %v963
        %v966 = vmul.f32 %v795, %v965
        %v967 = vadd.f32 %v956, %v966
        %v968 = vsel %vm840, %v967, -inf
        %969 = vmax.xlane.f32.xlu0 %v968
        %v970 = vpop.xlane.xlu0 %969
        %v971 = vsub.f32 %v967, %v970
        %v972 = vmul.f32 %v971, 1.442695
        %v973 = vpow.pop %v972
        %v974 = vsel %vm840, %v973, 0.0
        %975 = vadd.xlane.f32.xlu0 %v974
        %v976 = vpop.xlane.xlu0 %975
        %v977 = vrcp.pop %v976
        %v978 = vmul.f32 %v973, %v977
        %980 = vrot.lane.b32.xlu0 %v786, 112
        %v981 = vpop.permute.xlu0 %980
        %v984 = vsel %vm840, %v978, 0
        %986 = vmatprep.subr.mxu0 0.0
        %987 = vmatpush1.msra.mxu0 %v981
        %988 = vmatprep.subr.mxu0 0.0
        %989 = vmatpush1.msra.mxu0 0.0
        %990 = vmatprep.subr.mxu0 0.0
        %991 = vmatpush1.msra.mxu0 0.0
        %992 = vmatprep.subr.mxu0 0.0
        %993 = vmatpush1.msra.mxu0 0.0
        %994 = vmatprep.subr.mxu0 0.0
        %995 = vmatpush1.msra.mxu0 0.0
        %996 = vmatprep.subr.mxu0 0.0
        %997 = vmatpush1.msra.mxu0 0.0
        %998 = vmatprep.subr.mxu0 0.0
        %999 = vmatpush1.msra.mxu0 0.0
        %1000 = vmatprep.subr.mxu0 0.0
        %1001 = vmatpush1.msra.mxu0 0.0
        %1002 = vmatprep.subr.mxu0 0.0
        %1003 = vmatpush1.msra.mxu0 0.0
        %1004 = vmatprep.subr.mxu0 0.0
        %1005 = vmatpush1.msra.mxu0 0.0
        %1006 = vmatprep.subr.mxu0 0.0
        %1007 = vmatpush1.msra.mxu0 0.0
        %1008 = vmatprep.subr.mxu0 0.0
        %1009 = vmatpush1.msra.mxu0 0.0
        %1010 = vmatprep.subr.mxu0 0.0
        %1011 = vmatpush1.msra.mxu0 0.0
        %1012 = vmatprep.subr.mxu0 0.0
        %1013 = vmatpush1.msra.mxu0 0.0
        %1014 = vmatprep.subr.mxu0 0.0
        %1015 = vmatpush1.msra.mxu0 0.0
        %1016 = vmatprep.subr.mxu0 0.0
        %1017 = vmatpush1.msra.mxu0 0.0
        %1018 = vmatprep.subr.mxu0 0.0
        %1019 = vmatpush1.msra.mxu0 0.0
        %1020 = vmatprep.subr.mxu0 0.0
        %1021 = vmatpush1.msra.mxu0 0.0
        %1022 = vmatprep.subr.mxu0 0.0
        %1023 = vmatpush1.msra.mxu0 0.0
        %1024 = vmatprep.subr.mxu0 0.0
        %1025 = vmatpush1.msra.mxu0 0.0
        %1026 = vmatprep.subr.mxu0 0.0
        %1027 = vmatpush1.msra.mxu0 0.0
        %1028 = vmatprep.subr.mxu0 0.0
        %1029 = vmatpush1.msra.mxu0 0.0
        %1030 = vmatprep.subr.mxu0 0.0
        %1031 = vmatpush1.msra.mxu0 0.0
        %1032 = vmatprep.subr.mxu0 0.0
        %1033 = vmatpush1.msra.mxu0 0.0
        %1034 = vmatprep.subr.mxu0 0.0
        %1035 = vmatpush1.msra.mxu0 0.0
        %1036 = vmatprep.subr.mxu0 0.0
        %1037 = vmatpush1.msra.mxu0 0.0
        %1038 = vmatprep.subr.mxu0 0.0
        %1039 = vmatpush1.msra.mxu0 0.0
        %1040 = vmatprep.subr.mxu0 0.0
        %1041 = vmatpush1.msra.mxu0 0.0
        %1042 = vmatprep.subr.mxu0 0.0
        %1043 = vmatpush1.msra.mxu0 0.0
        %1044 = vmatprep.subr.mxu0 0.0
        %1045 = vmatpush1.msra.mxu0 0.0
        %1046 = vmatprep.subr.mxu0 0.0
        %1047 = vmatpush1.msra.mxu0 0.0
        %1048 = vmatprep.subr.mxu0 0.0
        %1049 = vmatpush1.msra.mxu0 0.0
        %1050 = vmatprep.mubr.f32.mxu0 0.0
        %1051 = vmatmul.mubr.f32.gmra.mrb[0].mxu0 %v984
        %v1052 = vpop.f32.mrb[0].mxu0
        %v1053 = vadd.f32 0.0, %v1052
        %v1054 = vpop.f32.mrb[0].mxu0
        %1055 = vdwg.mxu0
        %1057 = vrot.lane.b32.xlu0 %v1053, 16
        %v1058 = vpop.permute.xlu0 %1057
        %vm1060 = vcmask 130048
        %v1061 = vsel %vm1060, %v922, %v1058
        %v1062 = vld [vmem:[%s10] sm:$0xff]
        %v1063 = vld [vmem:[%s10 + $0x8] sm:$0xff]
        %v1064 = vld [vmem:[%s10 + $0x10] sm:$0xff]
        %v1065 = vld [vmem:[%s10 + $0x18] sm:$0xff]
        %v1066 = vld [vmem:[%s11] sm:$0x1]
        %v1068 = vlaneseq
        %v1069 = vshrl.u32 %v1068, 7
        %v1070 = vsub.s32 0, %v1069
        %v1071 = vrot.slane %v1066, %v1070
        %v1074 = vsel %vm547, %v1061, 0
        %1076 = vmatprep.subr.mxu0 0.0
        %1077 = vmatpush1.msra.mxu0 %v1062
        %1078 = vmatprep.subr.mxu0 0.0
        %1079 = vmatpush1.msra.mxu0 %v1063
        %1080 = vmatprep.subr.mxu0 0.0
        %1081 = vmatpush1.msra.mxu0 %v1064
        %1082 = vmatprep.subr.mxu0 0.0
        %1083 = vmatpush1.msra.mxu0 %v1065
        %1084 = vmatprep.subr.mxu0 0.0
        %1085 = vmatpush1.msra.mxu0 0.0
        %1086 = vmatprep.subr.mxu0 0.0
        %1087 = vmatpush1.msra.mxu0 0.0
        %1088 = vmatprep.subr.mxu0 0.0
        %1089 = vmatpush1.msra.mxu0 0.0
        %1090 = vmatprep.subr.mxu0 0.0
        %1091 = vmatpush1.msra.mxu0 0.0
        %1092 = vmatprep.subr.mxu0 0.0
        %1093 = vmatpush1.msra.mxu0 0.0
        %1094 = vmatprep.subr.mxu0 0.0
        %1095 = vmatpush1.msra.mxu0 0.0
        %1096 = vmatprep.subr.mxu0 0.0
        %1097 = vmatpush1.msra.mxu0 0.0
        %1098 = vmatprep.subr.mxu0 0.0
        %1099 = vmatpush1.msra.mxu0 0.0
        %1100 = vmatprep.subr.mxu0 0.0
        %1101 = vmatpush1.msra.mxu0 0.0
        %1102 = vmatprep.subr.mxu0 0.0
        %1103 = vmatpush1.msra.mxu0 0.0
        %1104 = vmatprep.subr.mxu0 0.0
        %1105 = vmatpush1.msra.mxu0 0.0
        %1106 = vmatprep.subr.mxu0 0.0
        %1107 = vmatpush1.msra.mxu0 0.0
        %1108 = vmatprep.subr.mxu0 0.0
        %1109 = vmatpush1.msra.mxu0 0.0
        %1110 = vmatprep.subr.mxu0 0.0
        %1111 = vmatpush1.msra.mxu0 0.0
        %1112 = vmatprep.subr.mxu0 0.0
        %1113 = vmatpush1.msra.mxu0 0.0
        %1114 = vmatprep.subr.mxu0 0.0
        %1115 = vmatpush1.msra.mxu0 0.0
        %1116 = vmatprep.subr.mxu0 0.0
        %1117 = vmatpush1.msra.mxu0 0.0
        %1118 = vmatprep.subr.mxu0 0.0
        %1119 = vmatpush1.msra.mxu0 0.0
        %1120 = vmatprep.subr.mxu0 0.0
        %1121 = vmatpush1.msra.mxu0 0.0
        %1122 = vmatprep.subr.mxu0 0.0
        %1123 = vmatpush1.msra.mxu0 0.0
        %1124 = vmatprep.subr.mxu0 0.0
        %1125 = vmatpush1.msra.mxu0 0.0
        %1126 = vmatprep.subr.mxu0 0.0
        %1127 = vmatpush1.msra.mxu0 0.0
        %1128 = vmatprep.subr.mxu0 0.0
        %1129 = vmatpush1.msra.mxu0 0.0
        %1130 = vmatprep.subr.mxu0 0.0
        %1131 = vmatpush1.msra.mxu0 0.0
        %1132 = vmatprep.subr.mxu0 0.0
        %1133 = vmatpush1.msra.mxu0 0.0
        %1134 = vmatprep.subr.mxu0 0.0
        %1135 = vmatpush1.msra.mxu0 0.0
        %1136 = vmatprep.subr.mxu0 0.0
        %1137 = vmatpush1.msra.mxu0 0.0
        %1138 = vmatprep.subr.mxu0 0.0
        %1139 = vmatpush1.msra.mxu0 0.0
        %1140 = vmatprep.mubr.f32.mxu0 0.0
        %1141 = vmatmul.mubr.f32.gmra.mrb[0].mxu0 %v1074
        %v1142 = vpop.f32.mrb[0].mxu0
        %v1143 = vadd.f32 %v1071, %v1142
        %v1144 = vpop.f32.mrb[0].mxu0
        %1145 = vdwg.mxu0
        %1146 = vst.msk [vmem:[%s520] sm:$0xff] %vm547, %v1143
        %s1147 = sand.u32 %s330, 1
        %s1148 = scalar_lea.sflag [#allocation4], %s1147
        %s1149 = sand.u32 %s330, 1
        %s1150 = smul.addr %s1149, 8
        %s1151 = scalar_lea.vmem [#allocation7], %s1150
        // Predicated region
        $region77: #{tpu_custom_call.1} parent=67 // pred_check
          %p1152 = pneg %p340
        $region78: #{tpu_custom_call.1} parent=67 // pred_check_branch
          %1154 = sbr.rel (%p1152) target = $region80
        $region79: #{tpu_custom_call.1} parent=67 // pred_region
          %s1156 = ssub.s32 128, 128
          %1157 = vsyncadd %s1148, %s1156
          %s1158 = sadd.s32 %s37, %s36
          %s1159 = smul.addr %s1158, 128
          %s1160 = scalar_lea.hbm %s12, %s1159
          %s1162 = sshll.u32 %s1151, 4
          %s1163 = int_to_ptr.vmem [resolvable:$true] %s1162
          %1165 = dma.vmem_to_hbm [thread:$0]  %s1163, 128, %s1160, %s1148
        $region80: #{tpu_custom_call.1} parent=67 // pred_fallthru
          _
      $region68: #{tpu_custom_call.1} parent=5 // pred_fallthru
        _
      %p1166 = scmp.le.s32.totalorder 2, %s27
      // Predicated region
      $region81: #{tpu_custom_call.1} parent=5 // pred_check
        %p1167 = pneg %p1166
      $region82: #{tpu_custom_call.1} parent=5 // pred_check_branch
        %1169 = sbr.rel (%p1167) target = $region84
      $region83: #{tpu_custom_call.1} parent=5 // pred_region
        %s1170 = ssub.s32 %s27, 2
        // Predicated region
        $region85: #{tpu_custom_call.1} parent=83 // pred_check
          %p1171 = pneg %p346
        $region86: #{tpu_custom_call.1} parent=83 // pred_check_branch
          %1173 = sbr.rel (%p1171) target = $region88
        $region87: #{tpu_custom_call.1} parent=83 // pred_region
          %s1174 = sand.u32 %s331, 1
          %s1175 = scalar_lea.sflag [#allocation4], %s1174
          %s1176 = sand.u32 %s331, 1
          %s1177 = smul.addr %s1176, 8
          %s1178 = scalar_lea.vmem [#allocation7], %s1177
          %1179 = dma.done %s1175, 128
        $region88: #{tpu_custom_call.1} parent=83 // pred_fallthru
          _
      $region84: #{tpu_custom_call.1} parent=5 // pred_fallthru
        _
    $region6: #{tpu_custom_call.1} parent=1 // loop_footer
      %s31 = sadd.s32 1, %s27
    $region7: #{tpu_custom_call.1} parent=1 // loop_footer_branch
      %26 = sbr.rel target = $region3
    $region8: #{tpu_custom_call.1} parent=1 // loop_exit
      _
    %1180 = vsyncpa [#allocation3], 1
    %s1181 = scalar_lea.sflag [#allocation3], 1
    %1182 = vsyncpa %s1181, 1
    %1183 = vsyncpa [#allocation6], 1
    %s1184 = scalar_lea.sflag [#allocation6], 1
    %1185 = vsyncpa %s1184, 1
    %1186 = vsyncpa [#allocation4], 1
    %s1187 = scalar_lea.sflag [#allocation4], 1
    %1188 = vsyncpa %s1187, 1

</llo_original>
